<compile_context>
chip_gen: v5e
topology: v5e:2x2
jax: 0.10.0
libtpu: 0.0.40
codegen_flags: <defaults>
</compile_context>

<pallas_src>
import math
from functools import partial

import jax
import jax.numpy as jnp
from jax.experimental import pallas as pl
from jax.experimental.pallas import tpu as pltpu


_TAPS = tuple((di, dj) for di in range(3) for dj in range(3))


# ---------------------------------------------------------------------------
# Fused Pallas kernel: conv1 -> conv2 -> pooling -> fc1 -> fc_monophonic
# ---------------------------------------------------------------------------

def _cnn_scatter_kernel(x_ref, m_ref, w1_ref, b1_ref, w2_ref, b2_ref, p_ref,
                        fw1_ref, fb1_ref, fw2_ref, fb2_ref,
                        emb_ref, clip_ref, *, Wc, S1, S2):
    """One batch element per grid step (grid=(B,), parallel).

    Canvas layout: the zero-padded (H, W) plane is flattened onto the lane dim
    with fixed row stride Wc, channels live on sublanes.  A 3x3 tap (di, dj)
    is therefore just a contiguous lane slice at offset di*Wc + dj, i.e. the
    im2col happens in-kernel with zero data expansion.
    """
    cout1 = w1_ref.shape[0]
    cout2 = w2_ref.shape[0]
    cin2 = w2_ref.shape[1] // 9

    x = x_ref[0]                                             # (1, L1) conv1 input canvas

    # ---- conv1: Cin=1 -> cout1, direct VPU accumulation over the 9 taps ----
    acc1 = jnp.zeros((cout1, S1), jnp.float32)
    for t, (di, dj) in enumerate(_TAPS):
        off = di * Wc + dj
        acc1 = acc1 + w1_ref[:, t:t + 1] * x[:, off:off + S1]
    # bias + ReLU, then zero everything outside the valid conv1-output window
    # so the result doubles as conv2's zero-padded input canvas.
    h1 = jnp.maximum(acc1 + b1_ref[...], 0.0) * m_ref[...]   # (cout1, S1)

    # ---- conv2: cout1 -> cout2, 9 accumulating MXU matmuls, lane-dense out --
    acc2 = jnp.zeros((cout2, S2), jnp.float32)
    for t, (di, dj) in enumerate(_TAPS):
        off = di * Wc + dj
        acc2 = acc2 + jnp.dot(w2_ref[:, t * cin2:(t + 1) * cin2],
                              h1[:, off:off + S2],
                              preferred_element_type=jnp.float32)
    y2 = jnp.maximum(acc2 + b2_ref[...], 0.0)                # (cout2, S2)

    # ---- pooling head: masked mean over W via one small matmul, then -------
    # ---- max-over-H + mean-over-H (torch.mean dim=3, torch.max/mean dim=2) -
    r = jnp.dot(y2, p_ref[...], preferred_element_type=jnp.float32)   # (cout2, K+4)
    feat = (jnp.max(r, axis=1, keepdims=True)
            + jnp.mean(r, axis=1, keepdims=True))                     # (cout2, 1)

    # ---- fc1 (ReLU) + fc_monophonic (sigmoid) epilogue ----------------------
    emb = jnp.maximum(
        jnp.dot(fw1_ref[...], feat, preferred_element_type=jnp.float32)
        + fb1_ref[...], 0.0)                                          # (cmid, 1)
    emb_ref[0, :, :] = emb.astype(emb_ref.dtype)

    logits = (jnp.dot(fw2_ref[...], emb, preferred_element_type=jnp.float32)
              + fb2_ref[...])                                         # (ncls, 1)
    clip_ref[0, :, :] = jax.nn.sigmoid(logits).astype(clip_ref.dtype)


def cnn_scatter_head(x_scat, params):
    """Fused head.  x_scat: (B, K, M) scattering magnitudes."""
    B, K, M = x_scat.shape
    c1 = params["conv1_w"].shape[0]            # 16
    c2 = params["conv2_w"].shape[0]            # 32
    cin2 = params["conv2_w"].shape[1]          # 16
    cmid = params["fc1_w"].shape[0]            # 16
    ncls = params["fc2_w"].shape[0]

    Hc, Wc = K + 6, M + 6                      # conv2-padded conv1-output canvas
    S = Hc * Wc                                # active canvas length
    S1 = S + 2                                 # conv1-output / conv2-input flat length
    S2 = (K + 4) * Wc                          # conv2-output flat length (valid cols < M+4)
    L1 = ((S1 + 2 * Wc + 2 + 127) // 128) * 128  # conv1 input canvas, lane-padded

    # bn0: eval-mode BatchNorm2d with init_bn weights (gamma=1, beta=0) and
    # default running stats (mean=0, var=1) reduces to a scalar scale.
    bn_scale = 1.0 / math.sqrt(1.0 + 1e-5)

    # conv1 input canvas: data at rows [4, 4+K), cols [4, 4+M), row stride Wc.
    canvas = jnp.pad(x_scat.astype(jnp.float32) * bn_scale, ((0, 0), (4, 2), (4, 2)))
    canvas = canvas.reshape(B, 1, S)
    canvas = jnp.pad(canvas, ((0, 0), (0, 0), (0, L1 - S)))           # (B, 1, L1)

    # Mask of valid conv1 outputs inside the conv2 input canvas:
    # rows [2, K+4), cols [2, M+4); everything else must be exactly zero.
    rows = jnp.arange(Hc)
    cols = jnp.arange(Wc)
    m2d = (((rows >= 2) & (rows < K + 4))[:, None]
           & ((cols >= 2) & (cols < M + 4))[None, :])
    mask1 = jnp.pad(m2d.reshape(1, S).astype(jnp.float32), ((0, 0), (0, S1 - S)))

    # Pooling matrix: masked mean over W for each output row h (= torch.mean dim=3).
    q = jnp.arange(S2)
    pool = (jax.nn.one_hot(q // Wc, K + 4, dtype=jnp.float32)
            * (q % Wc < M + 4).astype(jnp.float32)[:, None]) / float(M + 4)

    # Host-side weight re-layouts (tiny, one-off).
    w1 = params["conv1_w"].reshape(c1, 9)                              # (Cout1, tap)
    b1 = params["conv1_b"].reshape(c1, 1)
    w2 = params["conv2_w"].transpose(0, 2, 3, 1).reshape(c2, 9 * cin2)  # (Cout2, tap*Cin2)
    b2 = params["conv2_b"].reshape(c2, 1)
    fw1 = params["fc1_w"]                                              # (cmid, c2)  PyTorch (out, in)
    fb1 = params["fc1_b"].reshape(cmid, 1)
    fw2 = params["fc2_w"]                                              # (ncls, cmid)
    fb2 = params["fc2_b"].reshape(ncls, 1)

    full = lambda b: (0, 0)                    # weights/constants stay resident
    emb3, clip3 = pl.pallas_call(
        partial(_cnn_scatter_kernel, Wc=Wc, S1=S1, S2=S2),
        out_shape=(
            jax.ShapeDtypeStruct((B, cmid, 1), jnp.float32),
            jax.ShapeDtypeStruct((B, ncls, 1), jnp.float32),
        ),
        grid=(B,),
        in_specs=[
            pl.BlockSpec((1, 1, L1), lambda b: (b, 0, 0)),   # per-batch conv1 input canvas
            pl.BlockSpec((1, S1), full),                     # conv1-valid mask
            pl.BlockSpec((c1, 9), full),                     # conv1 weight taps
            pl.BlockSpec((c1, 1), full),                     # conv1 bias
            pl.BlockSpec((c2, 9 * cin2), full),              # conv2 weight taps
            pl.BlockSpec((c2, 1), full),                     # conv2 bias
            pl.BlockSpec((S2, K + 4), full),                 # mean-over-W pooling matrix
            pl.BlockSpec((cmid, c2), full),                  # fc1 weight
            pl.BlockSpec((cmid, 1), full),                   # fc1 bias
            pl.BlockSpec((ncls, cmid), full),                # fc_monophonic weight
            pl.BlockSpec((ncls, 1), full),                   # fc_monophonic bias
        ],
        out_specs=(
            pl.BlockSpec((1, cmid, 1), lambda b: (b, 0, 0)),
            pl.BlockSpec((1, ncls, 1), lambda b: (b, 0, 0)),
        ),
        compiler_params=pltpu.CompilerParams(
            dimension_semantics=("parallel",)),
    )(canvas, mask1, w1, b1, w2, b2, pool, fw1, fb1, fw2, fb2)

    return emb3[:, :, 0], clip3[:, :, 0]


# ---------------------------------------------------------------------------
# Scattering stand-in, params, forward
# ---------------------------------------------------------------------------

def scatter_standin(audio, J, filt):
    """Stand-in for kymatio Scattering1D: frame into hops of 2^J and take the
    magnitude of a filterbank response -> (B, n_coeffs, ceil(T/2^J))."""
    # TODO(synk): the kymatio Scattering1D wavelet scattering transform has no
    # clean Pallas equivalent; this deterministic frame+filterbank-magnitude
    # stand-in only reproduces the output layout (B, n_coeffs, T/2^J).
    B, T = audio.shape
    frame = 2 ** J
    M = math.ceil(T / frame)
    pad = M * frame - T
    framed = jnp.pad(audio, ((0, 0), (0, pad))).reshape(B, M, frame)
    return jnp.abs(jnp.einsum('bmf,kf->bkm', framed, filt))           # (B, K, M)


def xavier_uniform(key, shape, fan_in, fan_out):
    a = math.sqrt(6.0 / (fan_in + fan_out))
    return jax.random.uniform(key, shape, jnp.float32, -a, a)


def init_params(key, classes_num, J, Q, frame_len):
    ks = jax.random.split(key, 6)
    # approximate number of scattering coefficients for (J, Q)
    K = 1 + J * Q + (J * (J - 1) * Q) // 2
    params = {
        "scat_filt": jax.random.normal(ks[0], (K, frame_len), jnp.float32),
        "conv1_w": xavier_uniform(ks[1], (16, 1, 3, 3), 1 * 9, 16 * 9),
        "conv1_b": jnp.zeros((16,), jnp.float32),
        "conv2_w": xavier_uniform(ks[2], (32, 16, 3, 3), 16 * 9, 32 * 9),
        "conv2_b": jnp.zeros((32,), jnp.float32),
        "fc1_w": xavier_uniform(ks[3], (16, 32), 32, 16),        # PyTorch (out, in)
        "fc1_b": jnp.zeros((16,), jnp.float32),
        "fc2_w": xavier_uniform(ks[4], (classes_num, 16), 16, classes_num),
        "fc2_b": jnp.zeros((classes_num,), jnp.float32),
    }
    return params, K


def cnn_scatter_forward(audio, params, J):
    x = scatter_standin(audio, J, params["scat_filt"])               # (B, K, M)
    emb, clip = cnn_scatter_head(x, params)
    return {"clipwise_output": clip, "embedding": emb}


def cnn_scatter_reference(audio, params, J):
    """Pure-XLA reference of the same forward pass (correctness check only)."""
    x = scatter_standin(audio, J, params["scat_filt"])[:, None, :, :]
    x = x * (1.0 / math.sqrt(1.0 + 1e-5))                            # bn0 (eval, default stats)

    def conv(h, w, b):
        y = jax.lax.conv_general_dilated(
            h, w, window_strides=(1, 1), padding=((2, 2), (2, 2)),
            dimension_numbers=("NCHW", "OIHW", "NCHW"))
        return jax.nn.relu(y + b[None, :, None, None])

    x = conv(x, params["conv1_w"], params["conv1_b"])
    x = conv(x, params["conv2_w"], params["conv2_b"])
    x = jnp.mean(x, axis=3)
    feat = jnp.max(x, axis=2) + jnp.mean(x, axis=2)
    emb = jax.nn.relu(feat @ params["fc1_w"].T + params["fc1_b"])
    clip = jax.nn.sigmoid(emb @ params["fc2_w"].T + params["fc2_b"])
    return {"clipwise_output": clip, "embedding": emb}


# ---------------------------------------------------------------------------

if __name__ == "__main__":
    B = 2
    audio_length = 128
    J, Q = 3, 2
    classes_num = 4
    frame_len = 2 ** J

    key = jax.random.PRNGKey(0)
    pkey, xkey = jax.random.split(key)
    params, K = init_params(pkey, classes_num, J, Q, frame_len)
    audio = jax.random.normal(xkey, (B, audio_length), jnp.float32)

    out = jax.jit(partial(cnn_scatter_forward, J=J))(audio, params)
    jax.block_until_ready(out)

    ref = jax.jit(partial(cnn_scatter_reference, J=J))(audio, params)
    jax.block_until_ready(ref)

    assert out["embedding"].shape == (B, 16)
    assert out["clipwise_output"].shape == (B, classes_num)
    assert bool(jnp.all(out["clipwise_output"] >= 0.0)) and bool(
        jnp.all(out["clipwise_output"] <= 1.0))
    assert bool(jnp.allclose(out["embedding"], ref["embedding"],
                             atol=1e-3, rtol=1e-3))
    assert bool(jnp.allclose(out["clipwise_output"], ref["clipwise_output"],
                             atol=1e-3, rtol=1e-3))
    print("KERNEL_OK")
</pallas_src>

<mosaic_0001>
module attributes {stable_mosaic.version = 11 : i64} {
  func.func @_cnn_scatter_kernel(%arg0: i32, %arg1: memref<1x1x512xf32, #tpu.memory_space<vmem>>, %arg2: memref<1x420xf32, #tpu.memory_space<vmem>>, %arg3: memref<16x9xf32, #tpu.memory_space<vmem>>, %arg4: memref<16x1xf32, #tpu.memory_space<vmem>>, %arg5: memref<32x144xf32, #tpu.memory_space<vmem>>, %arg6: memref<32x1xf32, #tpu.memory_space<vmem>>, %arg7: memref<374x17xf32, #tpu.memory_space<vmem>>, %arg8: memref<16x32xf32, #tpu.memory_space<vmem>>, %arg9: memref<16x1xf32, #tpu.memory_space<vmem>>, %arg10: memref<4x16xf32, #tpu.memory_space<vmem>>, %arg11: memref<4x1xf32, #tpu.memory_space<vmem>>, %arg12: memref<1x16x1xf32, #tpu.memory_space<vmem>>, %arg13: memref<1x4x1xf32, #tpu.memory_space<vmem>>) attributes {dimension_semantics = [#tpu.dimension_semantics<parallel>], iteration_bounds = array<i64: 2>, scalar_prefetch = 0 : i64, scratch_operands = 0 : i64, tpu.core_type = #tpu.core_type<tc>, window_params = [{transform_indices = @transform_0, window_bounds = array<i64: 1, 1, 512>}, {pipeline_mode = #tpu.pipeline_mode<synchronous>, transform_indices = @transform_1, window_bounds = array<i64: 1, 420>}, {pipeline_mode = #tpu.pipeline_mode<synchronous>, transform_indices = @transform_2, window_bounds = array<i64: 16, 9>}, {pipeline_mode = #tpu.pipeline_mode<synchronous>, transform_indices = @transform_3, window_bounds = array<i64: 16, 1>}, {pipeline_mode = #tpu.pipeline_mode<synchronous>, transform_indices = @transform_4, window_bounds = array<i64: 32, 144>}, {pipeline_mode = #tpu.pipeline_mode<synchronous>, transform_indices = @transform_5, window_bounds = array<i64: 32, 1>}, {pipeline_mode = #tpu.pipeline_mode<synchronous>, transform_indices = @transform_6, window_bounds = array<i64: 374, 17>}, {pipeline_mode = #tpu.pipeline_mode<synchronous>, transform_indices = @transform_7, window_bounds = array<i64: 16, 32>}, {pipeline_mode = #tpu.pipeline_mode<synchronous>, transform_indices = @transform_8, window_bounds = array<i64: 16, 1>}, {pipeline_mode = #tpu.pipeline_mode<synchronous>, transform_indices = @transform_9, window_bounds = array<i64: 4, 16>}, {pipeline_mode = #tpu.pipeline_mode<synchronous>, transform_indices = @transform_10, window_bounds = array<i64: 4, 1>}, {transform_indices = @transform_11, window_bounds = array<i64: 1, 16, 1>}, {transform_indices = @transform_12, window_bounds = array<i64: 1, 4, 1>}]} {
    %c0 = arith.constant 0 : index
    %c0_0 = arith.constant 0 : index
    %c0_1 = arith.constant 0 : index
    %0 = vector.load %arg1[%c0, %c0_0, %c0_1] : memref<1x1x512xf32, #tpu.memory_space<vmem>>, vector<1x1x512xf32>
    %1 = vector.shape_cast %0 : vector<1x1x512xf32> to vector<1x512xf32>
    %cst = arith.constant 0.000000e+00 : f32
    %2 = vector.broadcast %cst : f32 to vector<16x420xf32>
    %c0_2 = arith.constant 0 : index
    %c0_3 = arith.constant 0 : index
    %3 = vector.load %arg3[%c0_2, %c0_3] : memref<16x9xf32, #tpu.memory_space<vmem>>, vector<16x1xf32>
    %4 = vector.extract_strided_slice %1 {offsets = [0, 0], sizes = [1, 420], strides = [1, 1]} : vector<1x512xf32> to vector<1x420xf32>
    %5 = vector.broadcast %3 : vector<16x1xf32> to vector<16x420xf32>
    %6 = vector.broadcast %4 : vector<1x420xf32> to vector<16x420xf32>
    %7 = arith.mulf %5, %6 : vector<16x420xf32>
    %8 = arith.addf %2, %7 : vector<16x420xf32>
    %c0_4 = arith.constant 0 : index
    %c1 = arith.constant 1 : index
    %9 = vector.load %arg3[%c0_4, %c1] : memref<16x9xf32, #tpu.memory_space<vmem>>, vector<16x1xf32>
    %10 = vector.extract_strided_slice %1 {offsets = [0, 1], sizes = [1, 420], strides = [1, 1]} : vector<1x512xf32> to vector<1x420xf32>
    %11 = vector.broadcast %9 : vector<16x1xf32> to vector<16x420xf32>
    %12 = vector.broadcast %10 : vector<1x420xf32> to vector<16x420xf32>
    %13 = arith.mulf %11, %12 : vector<16x420xf32>
    %14 = arith.addf %8, %13 : vector<16x420xf32>
    %c0_5 = arith.constant 0 : index
    %c2 = arith.constant 2 : index
    %15 = vector.load %arg3[%c0_5, %c2] : memref<16x9xf32, #tpu.memory_space<vmem>>, vector<16x1xf32>
    %16 = vector.extract_strided_slice %1 {offsets = [0, 2], sizes = [1, 420], strides = [1, 1]} : vector<1x512xf32> to vector<1x420xf32>
    %17 = vector.broadcast %15 : vector<16x1xf32> to vector<16x420xf32>
    %18 = vector.broadcast %16 : vector<1x420xf32> to vector<16x420xf32>
    %19 = arith.mulf %17, %18 : vector<16x420xf32>
    %20 = arith.addf %14, %19 : vector<16x420xf32>
    %c0_6 = arith.constant 0 : index
    %c3 = arith.constant 3 : index
    %21 = vector.load %arg3[%c0_6, %c3] : memref<16x9xf32, #tpu.memory_space<vmem>>, vector<16x1xf32>
    %22 = vector.extract_strided_slice %1 {offsets = [0, 22], sizes = [1, 420], strides = [1, 1]} : vector<1x512xf32> to vector<1x420xf32>
    %23 = vector.broadcast %21 : vector<16x1xf32> to vector<16x420xf32>
    %24 = vector.broadcast %22 : vector<1x420xf32> to vector<16x420xf32>
    %25 = arith.mulf %23, %24 : vector<16x420xf32>
    %26 = arith.addf %20, %25 : vector<16x420xf32>
    %c0_7 = arith.constant 0 : index
    %c4 = arith.constant 4 : index
    %27 = vector.load %arg3[%c0_7, %c4] : memref<16x9xf32, #tpu.memory_space<vmem>>, vector<16x1xf32>
    %28 = vector.extract_strided_slice %1 {offsets = [0, 23], sizes = [1, 420], strides = [1, 1]} : vector<1x512xf32> to vector<1x420xf32>
    %29 = vector.broadcast %27 : vector<16x1xf32> to vector<16x420xf32>
    %30 = vector.broadcast %28 : vector<1x420xf32> to vector<16x420xf32>
    %31 = arith.mulf %29, %30 : vector<16x420xf32>
    %32 = arith.addf %26, %31 : vector<16x420xf32>
    %c0_8 = arith.constant 0 : index
    %c5 = arith.constant 5 : index
    %33 = vector.load %arg3[%c0_8, %c5] : memref<16x9xf32, #tpu.memory_space<vmem>>, vector<16x1xf32>
    %34 = vector.extract_strided_slice %1 {offsets = [0, 24], sizes = [1, 420], strides = [1, 1]} : vector<1x512xf32> to vector<1x420xf32>
    %35 = vector.broadcast %33 : vector<16x1xf32> to vector<16x420xf32>
    %36 = vector.broadcast %34 : vector<1x420xf32> to vector<16x420xf32>
    %37 = arith.mulf %35, %36 : vector<16x420xf32>
    %38 = arith.addf %32, %37 : vector<16x420xf32>
    %c0_9 = arith.constant 0 : index
    %c6 = arith.constant 6 : index
    %39 = vector.load %arg3[%c0_9, %c6] : memref<16x9xf32, #tpu.memory_space<vmem>>, vector<16x1xf32>
    %40 = vector.extract_strided_slice %1 {offsets = [0, 44], sizes = [1, 420], strides = [1, 1]} : vector<1x512xf32> to vector<1x420xf32>
    %41 = vector.broadcast %39 : vector<16x1xf32> to vector<16x420xf32>
    %42 = vector.broadcast %40 : vector<1x420xf32> to vector<16x420xf32>
    %43 = arith.mulf %41, %42 : vector<16x420xf32>
    %44 = arith.addf %38, %43 : vector<16x420xf32>
    %c0_10 = arith.constant 0 : index
    %c7 = arith.constant 7 : index
    %45 = vector.load %arg3[%c0_10, %c7] : memref<16x9xf32, #tpu.memory_space<vmem>>, vector<16x1xf32>
    %46 = vector.extract_strided_slice %1 {offsets = [0, 45], sizes = [1, 420], strides = [1, 1]} : vector<1x512xf32> to vector<1x420xf32>
    %47 = vector.broadcast %45 : vector<16x1xf32> to vector<16x420xf32>
    %48 = vector.broadcast %46 : vector<1x420xf32> to vector<16x420xf32>
    %49 = arith.mulf %47, %48 : vector<16x420xf32>
    %50 = arith.addf %44, %49 : vector<16x420xf32>
    %c0_11 = arith.constant 0 : index
    %c8 = arith.constant 8 : index
    %51 = vector.load %arg3[%c0_11, %c8] : memref<16x9xf32, #tpu.memory_space<vmem>>, vector<16x1xf32>
    %52 = vector.extract_strided_slice %1 {offsets = [0, 46], sizes = [1, 420], strides = [1, 1]} : vector<1x512xf32> to vector<1x420xf32>
    %53 = vector.broadcast %51 : vector<16x1xf32> to vector<16x420xf32>
    %54 = vector.broadcast %52 : vector<1x420xf32> to vector<16x420xf32>
    %55 = arith.mulf %53, %54 : vector<16x420xf32>
    %56 = arith.addf %50, %55 : vector<16x420xf32>
    %c0_12 = arith.constant 0 : index
    %c0_13 = arith.constant 0 : index
    %57 = vector.load %arg4[%c0_12, %c0_13] : memref<16x1xf32, #tpu.memory_space<vmem>>, vector<16x1xf32>
    %58 = vector.broadcast %57 : vector<16x1xf32> to vector<16x420xf32>
    %59 = arith.addf %56, %58 : vector<16x420xf32>
    %cst_14 = arith.constant 0.000000e+00 : f32
    %60 = vector.broadcast %cst_14 : f32 to vector<16x420xf32>
    %61 = arith.maximumf %59, %60 : vector<16x420xf32>
    %c0_15 = arith.constant 0 : index
    %c0_16 = arith.constant 0 : index
    %62 = vector.load %arg2[%c0_15, %c0_16] : memref<1x420xf32, #tpu.memory_space<vmem>>, vector<1x420xf32>
    %63 = vector.broadcast %62 : vector<1x420xf32> to vector<16x420xf32>
    %64 = arith.mulf %61, %63 : vector<16x420xf32>
    %cst_17 = arith.constant 0.000000e+00 : f32
    %65 = vector.broadcast %cst_17 : f32 to vector<32x374xf32>
    %c0_18 = arith.constant 0 : index
    %c0_19 = arith.constant 0 : index
    %66 = vector.load %arg5[%c0_18, %c0_19] : memref<32x144xf32, #tpu.memory_space<vmem>>, vector<32x16xf32>
    %67 = vector.extract_strided_slice %64 {offsets = [0, 0], sizes = [16, 374], strides = [1, 1]} : vector<16x420xf32> to vector<16x374xf32>
    %cst_20 = arith.constant dense<0.000000e+00> : vector<32x374xf32>
    %68 = tpu.matmul %66, %67, %cst_20 {dimension_numbers = #tpu.dot_dimension_numbers<[1], [0], [0], [1], [0, 0, 1, 1], [], []>} : vector<32x16xf32>, vector<16x374xf32>, vector<32x374xf32> -> vector<32x374xf32>
    %69 = arith.addf %65, %68 : vector<32x374xf32>
    %c0_21 = arith.constant 0 : index
    %c16 = arith.constant 16 : index
    %70 = vector.load %arg5[%c0_21, %c16] : memref<32x144xf32, #tpu.memory_space<vmem>>, vector<32x16xf32>
    %71 = vector.extract_strided_slice %64 {offsets = [0, 1], sizes = [16, 374], strides = [1, 1]} : vector<16x420xf32> to vector<16x374xf32>
    %cst_22 = arith.constant dense<0.000000e+00> : vector<32x374xf32>
    %72 = tpu.matmul %70, %71, %cst_22 {dimension_numbers = #tpu.dot_dimension_numbers<[1], [0], [0], [1], [0, 0, 1, 1], [], []>} : vector<32x16xf32>, vector<16x374xf32>, vector<32x374xf32> -> vector<32x374xf32>
    %73 = arith.addf %69, %72 : vector<32x374xf32>
    %c0_23 = arith.constant 0 : index
    %c32 = arith.constant 32 : index
    %74 = vector.load %arg5[%c0_23, %c32] : memref<32x144xf32, #tpu.memory_space<vmem>>, vector<32x16xf32>
    %75 = vector.extract_strided_slice %64 {offsets = [0, 2], sizes = [16, 374], strides = [1, 1]} : vector<16x420xf32> to vector<16x374xf32>
    %cst_24 = arith.constant dense<0.000000e+00> : vector<32x374xf32>
    %76 = tpu.matmul %74, %75, %cst_24 {dimension_numbers = #tpu.dot_dimension_numbers<[1], [0], [0], [1], [0, 0, 1, 1], [], []>} : vector<32x16xf32>, vector<16x374xf32>, vector<32x374xf32> -> vector<32x374xf32>
    %77 = arith.addf %73, %76 : vector<32x374xf32>
    %c0_25 = arith.constant 0 : index
    %c48 = arith.constant 48 : index
    %78 = vector.load %arg5[%c0_25, %c48] : memref<32x144xf32, #tpu.memory_space<vmem>>, vector<32x16xf32>
    %79 = vector.extract_strided_slice %64 {offsets = [0, 22], sizes = [16, 374], strides = [1, 1]} : vector<16x420xf32> to vector<16x374xf32>
    %cst_26 = arith.constant dense<0.000000e+00> : vector<32x374xf32>
    %80 = tpu.matmul %78, %79, %cst_26 {dimension_numbers = #tpu.dot_dimension_numbers<[1], [0], [0], [1], [0, 0, 1, 1], [], []>} : vector<32x16xf32>, vector<16x374xf32>, vector<32x374xf32> -> vector<32x374xf32>
    %81 = arith.addf %77, %80 : vector<32x374xf32>
    %c0_27 = arith.constant 0 : index
    %c64 = arith.constant 64 : index
    %82 = vector.load %arg5[%c0_27, %c64] : memref<32x144xf32, #tpu.memory_space<vmem>>, vector<32x16xf32>
    %83 = vector.extract_strided_slice %64 {offsets = [0, 23], sizes = [16, 374], strides = [1, 1]} : vector<16x420xf32> to vector<16x374xf32>
    %cst_28 = arith.constant dense<0.000000e+00> : vector<32x374xf32>
    %84 = tpu.matmul %82, %83, %cst_28 {dimension_numbers = #tpu.dot_dimension_numbers<[1], [0], [0], [1], [0, 0, 1, 1], [], []>} : vector<32x16xf32>, vector<16x374xf32>, vector<32x374xf32> -> vector<32x374xf32>
    %85 = arith.addf %81, %84 : vector<32x374xf32>
    %c0_29 = arith.constant 0 : index
    %c80 = arith.constant 80 : index
    %86 = vector.load %arg5[%c0_29, %c80] : memref<32x144xf32, #tpu.memory_space<vmem>>, vector<32x16xf32>
    %87 = vector.extract_strided_slice %64 {offsets = [0, 24], sizes = [16, 374], strides = [1, 1]} : vector<16x420xf32> to vector<16x374xf32>
    %cst_30 = arith.constant dense<0.000000e+00> : vector<32x374xf32>
    %88 = tpu.matmul %86, %87, %cst_30 {dimension_numbers = #tpu.dot_dimension_numbers<[1], [0], [0], [1], [0, 0, 1, 1], [], []>} : vector<32x16xf32>, vector<16x374xf32>, vector<32x374xf32> -> vector<32x374xf32>
    %89 = arith.addf %85, %88 : vector<32x374xf32>
    %c0_31 = arith.constant 0 : index
    %c96 = arith.constant 96 : index
    %90 = vector.load %arg5[%c0_31, %c96] : memref<32x144xf32, #tpu.memory_space<vmem>>, vector<32x16xf32>
    %91 = vector.extract_strided_slice %64 {offsets = [0, 44], sizes = [16, 374], strides = [1, 1]} : vector<16x420xf32> to vector<16x374xf32>
    %cst_32 = arith.constant dense<0.000000e+00> : vector<32x374xf32>
    %92 = tpu.matmul %90, %91, %cst_32 {dimension_numbers = #tpu.dot_dimension_numbers<[1], [0], [0], [1], [0, 0, 1, 1], [], []>} : vector<32x16xf32>, vector<16x374xf32>, vector<32x374xf32> -> vector<32x374xf32>
    %93 = arith.addf %89, %92 : vector<32x374xf32>
    %c0_33 = arith.constant 0 : index
    %c112 = arith.constant 112 : index
    %94 = vector.load %arg5[%c0_33, %c112] : memref<32x144xf32, #tpu.memory_space<vmem>>, vector<32x16xf32>
    %95 = vector.extract_strided_slice %64 {offsets = [0, 45], sizes = [16, 374], strides = [1, 1]} : vector<16x420xf32> to vector<16x374xf32>
    %cst_34 = arith.constant dense<0.000000e+00> : vector<32x374xf32>
    %96 = tpu.matmul %94, %95, %cst_34 {dimension_numbers = #tpu.dot_dimension_numbers<[1], [0], [0], [1], [0, 0, 1, 1], [], []>} : vector<32x16xf32>, vector<16x374xf32>, vector<32x374xf32> -> vector<32x374xf32>
    %97 = arith.addf %93, %96 : vector<32x374xf32>
    %c0_35 = arith.constant 0 : index
    %c128 = arith.constant 128 : index
    %98 = vector.load %arg5[%c0_35, %c128] : memref<32x144xf32, #tpu.memory_space<vmem>>, vector<32x16xf32>
    %99 = vector.extract_strided_slice %64 {offsets = [0, 46], sizes = [16, 374], strides = [1, 1]} : vector<16x420xf32> to vector<16x374xf32>
    %cst_36 = arith.constant dense<0.000000e+00> : vector<32x374xf32>
    %100 = tpu.matmul %98, %99, %cst_36 {dimension_numbers = #tpu.dot_dimension_numbers<[1], [0], [0], [1], [0, 0, 1, 1], [], []>} : vector<32x16xf32>, vector<16x374xf32>, vector<32x374xf32> -> vector<32x374xf32>
    %101 = arith.addf %97, %100 : vector<32x374xf32>
    %c0_37 = arith.constant 0 : index
    %c0_38 = arith.constant 0 : index
    %102 = vector.load %arg6[%c0_37, %c0_38] : memref<32x1xf32, #tpu.memory_space<vmem>>, vector<32x1xf32>
    %103 = vector.broadcast %102 : vector<32x1xf32> to vector<32x374xf32>
    %104 = arith.addf %101, %103 : vector<32x374xf32>
    %cst_39 = arith.constant 0.000000e+00 : f32
    %105 = vector.broadcast %cst_39 : f32 to vector<32x374xf32>
    %106 = arith.maximumf %104, %105 : vector<32x374xf32>
    %c0_40 = arith.constant 0 : index
    %c0_41 = arith.constant 0 : index
    %107 = vector.load %arg7[%c0_40, %c0_41] : memref<374x17xf32, #tpu.memory_space<vmem>>, vector<374x17xf32>
    %cst_42 = arith.constant dense<0.000000e+00> : vector<32x17xf32>
    %108 = tpu.matmul %106, %107, %cst_42 {dimension_numbers = #tpu.dot_dimension_numbers<[1], [0], [0], [1], [0, 0, 1, 1], [], []>} : vector<32x374xf32>, vector<374x17xf32>, vector<32x17xf32> -> vector<32x17xf32>
    %cst_43 = arith.constant dense<0xFF800000> : vector<32xf32>
    %109 = vector.multi_reduction <maximumf>, %108, %cst_43 [1] : vector<32x17xf32> to vector<32xf32>
    %110 = vector.shape_cast %109 : vector<32xf32> to vector<32x1xf32>
    %cst_44 = arith.constant dense<0.000000e+00> : vector<32xf32>
    %111 = vector.multi_reduction <add>, %108, %cst_44 [1] : vector<32x17xf32> to vector<32xf32>
    %112 = vector.shape_cast %111 : vector<32xf32> to vector<32x1xf32>
    %cst_45 = arith.constant 1.700000e+01 : f32
    %113 = vector.broadcast %cst_45 : f32 to vector<32x1xf32>
    %114 = arith.divf %112, %113 : vector<32x1xf32>
    %115 = arith.addf %110, %114 : vector<32x1xf32>
    %c0_46 = arith.constant 0 : index
    %c0_47 = arith.constant 0 : index
    %116 = vector.load %arg8[%c0_46, %c0_47] : memref<16x32xf32, #tpu.memory_space<vmem>>, vector<16x32xf32>
    %cst_48 = arith.constant dense<0.000000e+00> : vector<16x1xf32>
    %117 = tpu.matmul %116, %115, %cst_48 {dimension_numbers = #tpu.dot_dimension_numbers<[1], [0], [0], [1], [0, 0, 1, 1], [], []>} : vector<16x32xf32>, vector<32x1xf32>, vector<16x1xf32> -> vector<16x1xf32>
    %c0_49 = arith.constant 0 : index
    %c0_50 = arith.constant 0 : index
    %118 = vector.load %arg9[%c0_49, %c0_50] : memref<16x1xf32, #tpu.memory_space<vmem>>, vector<16x1xf32>
    %119 = arith.addf %117, %118 : vector<16x1xf32>
    %cst_51 = arith.constant 0.000000e+00 : f32
    %120 = vector.broadcast %cst_51 : f32 to vector<16x1xf32>
    %121 = arith.maximumf %119, %120 : vector<16x1xf32>
    %c0_52 = arith.constant 0 : index
    %c0_53 = arith.constant 0 : index
    %c0_54 = arith.constant 0 : index
    %122 = vector.load %arg12[%c0_52, %c0_53, %c0_54] : memref<1x16x1xf32, #tpu.memory_space<vmem>>, vector<1x16x1xf32>
    %123 = vector.shape_cast %122 : vector<1x16x1xf32> to vector<16x1xf32>
    %124 = vector.shape_cast %121 : vector<16x1xf32> to vector<1x16x1xf32>
    tpu.vector_store %arg12[%c0_52, %c0_53, %c0_54], %124 {strides = array<i32>} : memref<1x16x1xf32, #tpu.memory_space<vmem>>, vector<1x16x1xf32>,
    %c0_55 = arith.constant 0 : index
    %c0_56 = arith.constant 0 : index
    %125 = vector.load %arg10[%c0_55, %c0_56] : memref<4x16xf32, #tpu.memory_space<vmem>>, vector<4x16xf32>
    %cst_57 = arith.constant dense<0.000000e+00> : vector<4x1xf32>
    %126 = tpu.matmul %125, %121, %cst_57 {dimension_numbers = #tpu.dot_dimension_numbers<[1], [0], [0], [1], [0, 0, 1, 1], [], []>} : vector<4x16xf32>, vector<16x1xf32>, vector<4x1xf32> -> vector<4x1xf32>
    %c0_58 = arith.constant 0 : index
    %c0_59 = arith.constant 0 : index
    %127 = vector.load %arg11[%c0_58, %c0_59] : memref<4x1xf32, #tpu.memory_space<vmem>>, vector<4x1xf32>
    %128 = arith.addf %126, %127 : vector<4x1xf32>
    %129 = arith.negf %128 : vector<4x1xf32>
    %130 = math.exp %129 : vector<4x1xf32>
    %cst_60 = arith.constant 1.000000e+00 : f32
    %131 = vector.broadcast %cst_60 : f32 to vector<4x1xf32>
    %132 = arith.addf %131, %130 : vector<4x1xf32>
    %133 = arith.divf %131, %132 : vector<4x1xf32>
    %c0_61 = arith.constant 0 : index
    %c0_62 = arith.constant 0 : index
    %c0_63 = arith.constant 0 : index
    %134 = vector.load %arg13[%c0_61, %c0_62, %c0_63] : memref<1x4x1xf32, #tpu.memory_space<vmem>>, vector<1x4x1xf32>
    %135 = vector.shape_cast %134 : vector<1x4x1xf32> to vector<4x1xf32>
    %136 = vector.shape_cast %133 : vector<4x1xf32> to vector<1x4x1xf32>
    tpu.vector_store %arg13[%c0_61, %c0_62, %c0_63], %136 {strides = array<i32>} : memref<1x4x1xf32, #tpu.memory_space<vmem>>, vector<1x4x1xf32>,
    return
  }
  func.func @transform_0(%arg0: i32) -> (i32, i32, i32) {
    %c0_i32 = arith.constant 0 : i32
    %c0_i32_0 = arith.constant 0 : i32
    %c0_i32_1 = arith.constant 0 : i32
    return %arg0, %c0_i32, %c0_i32_0 : i32, i32, i32
  }
  func.func @transform_1(%arg0: i32) -> (i32, i32) {
    %c0_i32 = arith.constant 0 : i32
    %c0_i32_0 = arith.constant 0 : i32
    %c0_i32_1 = arith.constant 0 : i32
    return %c0_i32, %c0_i32_0 : i32, i32
  }
  func.func @transform_2(%arg0: i32) -> (i32, i32) {
    %c0_i32 = arith.constant 0 : i32
    %c0_i32_0 = arith.constant 0 : i32
    %c0_i32_1 = arith.constant 0 : i32
    return %c0_i32, %c0_i32_0 : i32, i32
  }
  func.func @transform_3(%arg0: i32) -> (i32, i32) {
    %c0_i32 = arith.constant 0 : i32
    %c0_i32_0 = arith.constant 0 : i32
    %c0_i32_1 = arith.constant 0 : i32
    return %c0_i32, %c0_i32_0 : i32, i32
  }
  func.func @transform_4(%arg0: i32) -> (i32, i32) {
    %c0_i32 = arith.constant 0 : i32
    %c0_i32_0 = arith.constant 0 : i32
    %c0_i32_1 = arith.constant 0 : i32
    return %c0_i32, %c0_i32_0 : i32, i32
  }
  func.func @transform_5(%arg0: i32) -> (i32, i32) {
    %c0_i32 = arith.constant 0 : i32
    %c0_i32_0 = arith.constant 0 : i32
    %c0_i32_1 = arith.constant 0 : i32
    return %c0_i32, %c0_i32_0 : i32, i32
  }
  func.func @transform_6(%arg0: i32) -> (i32, i32) {
    %c0_i32 = arith.constant 0 : i32
    %c0_i32_0 = arith.constant 0 : i32
    %c0_i32_1 = arith.constant 0 : i32
    return %c0_i32, %c0_i32_0 : i32, i32
  }
  func.func @transform_7(%arg0: i32) -> (i32, i32) {
    %c0_i32 = arith.constant 0 : i32
    %c0_i32_0 = arith.constant 0 : i32
    %c0_i32_1 = arith.constant 0 : i32
    return %c0_i32, %c0_i32_0 : i32, i32
  }
  func.func @transform_8(%arg0: i32) -> (i32, i32) {
    %c0_i32 = arith.constant 0 : i32
    %c0_i32_0 = arith.constant 0 : i32
    %c0_i32_1 = arith.constant 0 : i32
    return %c0_i32, %c0_i32_0 : i32, i32
  }
  func.func @transform_9(%arg0: i32) -> (i32, i32) {
    %c0_i32 = arith.constant 0 : i32
    %c0_i32_0 = arith.constant 0 : i32
    %c0_i32_1 = arith.constant 0 : i32
    return %c0_i32, %c0_i32_0 : i32, i32
  }
  func.func @transform_10(%arg0: i32) -> (i32, i32) {
    %c0_i32 = arith.constant 0 : i32
    %c0_i32_0 = arith.constant 0 : i32
    %c0_i32_1 = arith.constant 0 : i32
    return %c0_i32, %c0_i32_0 : i32, i32
  }
  func.func @transform_11(%arg0: i32) -> (i32, i32, i32) {
    %c0_i32 = arith.constant 0 : i32
    %c0_i32_0 = arith.constant 0 : i32
    %c0_i32_1 = arith.constant 0 : i32
    return %arg0, %c0_i32, %c0_i32_0 : i32, i32, i32
  }
  func.func @transform_12(%arg0: i32) -> (i32, i32, i32) {
    %c0_i32 = arith.constant 0 : i32
    %c0_i32_0 = arith.constant 0 : i32
    %c0_i32_1 = arith.constant 0 : i32
    return %arg0, %c0_i32, %c0_i32_0 : i32, i32, i32
  }
}

</mosaic_0001>

<llo_original>
// kernel: cnn_scatter_forward.1
$region0: #{cnn_scatter_forward.1}
  #allocation0 [shape = 'u32[]', space=smem, size = 0x4, offset = 0x4, fixed_abs, tag = 'smem constant byte address 0x4 - core index']
  #allocation1 [shape = 'u32[72,128]{1,0:T(1,128)}', space=vmem, size = 0x9000, scoped, tag = 'internal scratch']
  %s0 = inlined_call_operand.vmem [shape: f32[2,1,512], index: 0, kind: input, shape index: {}]
  %s1 = inlined_call_operand.vmem [shape: f32[1,420], index: 1, kind: input, shape index: {}]
  %s2 = inlined_call_operand.vmem [shape: f32[16,9], index: 2, kind: input, shape index: {}]
  %s3 = inlined_call_operand.vmem [shape: f32[16,1], index: 3, kind: input, shape index: {}]
  %s4 = inlined_call_operand.vmem [shape: f32[32,144], index: 4, kind: input, shape index: {}]
  %s5 = inlined_call_operand.vmem [shape: f32[32,1], index: 5, kind: input, shape index: {}]
  %s6 = inlined_call_operand.vmem [shape: f32[374,17], index: 6, kind: input, shape index: {}]
  %s7 = inlined_call_operand.vmem [shape: f32[16,32], index: 7, kind: input, shape index: {}]
  %s8 = inlined_call_operand.vmem [shape: f32[16,1], index: 8, kind: input, shape index: {}]
  %s9 = inlined_call_operand.vmem [shape: f32[4,16], index: 9, kind: input, shape index: {}]
  %s10 = inlined_call_operand.vmem [shape: f32[4,1], index: 10, kind: input, shape index: {}]
  %s11 = inlined_call_operand.vmem [shape: f32[2,16,1], index: 11, kind: output, shape index: {0}]
  %s12 = inlined_call_operand.vmem [shape: f32[2,4,1], index: 12, kind: output, shape index: {1}]
  %13 = xla_tuple %s11, %s12
  %s14 = sld [smem:[#allocation0]]
  $region85: #{cnn_scatter_forward.1} parent=0
    _
  %s16 = ssub.s32 1, %s14
  %s17 = scalar_select 0, %s16, %s14
  loop: start=0, step=1, limit=4
  $region2: #{cnn_scatter_forward.1} parent=0 // loop_pre_header
    _
  $region3: #{cnn_scatter_forward.1} parent=0 // loop_header
    %s19 = sphi 0, %s23
    %p20 = scmp.ge.s32.totalorder %s19, 4
    %s29 = sphi 0, %s31
    %s32 = sphi 0, %s29
    %s33 = sphi 0, %s32
    %s49 = sphi 0, %s33
    %s53 = sphi 0, %s53
    %s55 = sphi 0, %s53
    %s56 = sphi 0, %s55
    %s70 = sphi 0, %s56
    %s74 = sphi 0, %s74
    %s76 = sphi 0, %s74
    %s77 = sphi 0, %s76
    %s91 = sphi 0, %s77
    %s95 = sphi 0, %s95
    %s97 = sphi 0, %s95
    %s98 = sphi 0, %s97
    %s112 = sphi 0, %s98
    %s116 = sphi 0, %s116
    %s118 = sphi 0, %s116
    %s119 = sphi 0, %s118
    %s133 = sphi 0, %s119
    %s137 = sphi 0, %s137
    %s139 = sphi 0, %s137
    %s140 = sphi 0, %s139
    %s154 = sphi 0, %s140
    %s158 = sphi 0, %s158
    %s160 = sphi 0, %s158
    %s161 = sphi 0, %s160
    %s175 = sphi 0, %s161
    %s179 = sphi 0, %s179
    %s181 = sphi 0, %s179
    %s182 = sphi 0, %s181
    %s196 = sphi 0, %s182
    %s200 = sphi 0, %s200
    %s202 = sphi 0, %s200
    %s203 = sphi 0, %s202
    %s217 = sphi 0, %s203
    %s221 = sphi 0, %s221
    %s223 = sphi 0, %s221
    %s224 = sphi 0, %s223
    %s238 = sphi 0, %s224
    %s242 = sphi 0, %s242
    %s244 = sphi 0, %s242
    %s245 = sphi 0, %s244
    %s259 = sphi 0, %s245
    %s265 = sphi 0, %s267
    %s268 = sphi 0, %s265
    %s269 = sphi 0, %s268
    %s285 = sphi 0, %s269
    %s291 = sphi 0, %s293
    %s294 = sphi 0, %s291
    %s295 = sphi 0, %s294
    %s311 = sphi 0, %s295
  $region4: #{cnn_scatter_forward.1} parent=0 // loop_header_branch
    %22 = sbr.rel (%p20) target = $region8
  $region5: #{cnn_scatter_forward.1} parent=0 // loop_body
    %s24 = ssub.s32 %s19, 1
    %s25 = ssub.s32 %s19, 2
    %s26 = sadd.s32 %s19, 1
    %s27 = ssub.s32 %s19, %s26
    %p28 = scmp.eq.s32.totalorder %s27, 0
    %s30 = sadd.s32 %s29, 1
    %s31 = scalar_select %p28, %s29, %s30
    %p34 = pneg %p28
    %p35 = scmp.eq.s32.totalorder %s19, 1
    %p36 = por %p34, %p35
    %p37 = scmp.ne.s32.totalorder %s29, %s32
    %p38 = scmp.eq.s32.totalorder %s19, 0
    %p39 = por %p37, %p38
    %p40 = scmp.ne.s32.totalorder %s29, %s32
    %p41 = scmp.eq.s32.totalorder %s24, 1
    %p42 = por %p40, %p41
    %p43 = scmp.ne.s32.totalorder %s32, %s33
    %p44 = scmp.eq.s32.totalorder %s24, 0
    %p45 = por %p43, %p44
    %p46 = scmp.ne.s32.totalorder %s32, %s33
    %p47 = scmp.eq.s32.totalorder %s25, 1
    %p48 = por %p46, %p47
    %p50 = scmp.ne.s32.totalorder %s33, %s49
    %p51 = scmp.eq.s32.totalorder %s25, 0
    %p52 = por %p50, %p51
    %s54 = sadd.s32 %s53, 1
    %p57 = scmp.eq.s32.totalorder %s19, 1
    %p58 = scmp.ne.s32.totalorder %s53, %s55
    %p59 = scmp.eq.s32.totalorder %s19, 0
    %p60 = por %p58, %p59
    %p61 = scmp.ne.s32.totalorder %s53, %s55
    %p62 = scmp.eq.s32.totalorder %s24, 1
    %p63 = por %p61, %p62
    %p64 = scmp.ne.s32.totalorder %s55, %s56
    %p65 = scmp.eq.s32.totalorder %s24, 0
    %p66 = por %p64, %p65
    %p67 = scmp.ne.s32.totalorder %s55, %s56
    %p68 = scmp.eq.s32.totalorder %s25, 1
    %p69 = por %p67, %p68
    %p71 = scmp.ne.s32.totalorder %s56, %s70
    %p72 = scmp.eq.s32.totalorder %s25, 0
    %p73 = por %p71, %p72
    %s75 = sadd.s32 %s74, 1
    %p78 = scmp.eq.s32.totalorder %s19, 1
    %p79 = scmp.ne.s32.totalorder %s74, %s76
    %p80 = scmp.eq.s32.totalorder %s19, 0
    %p81 = por %p79, %p80
    %p82 = scmp.ne.s32.totalorder %s74, %s76
    %p83 = scmp.eq.s32.totalorder %s24, 1
    %p84 = por %p82, %p83
    %p85 = scmp.ne.s32.totalorder %s76, %s77
    %p86 = scmp.eq.s32.totalorder %s24, 0
    %p87 = por %p85, %p86
    %p88 = scmp.ne.s32.totalorder %s76, %s77
    %p89 = scmp.eq.s32.totalorder %s25, 1
    %p90 = por %p88, %p89
    %p92 = scmp.ne.s32.totalorder %s77, %s91
    %p93 = scmp.eq.s32.totalorder %s25, 0
    %p94 = por %p92, %p93
    %s96 = sadd.s32 %s95, 1
    %p99 = scmp.eq.s32.totalorder %s19, 1
    %p100 = scmp.ne.s32.totalorder %s95, %s97
    %p101 = scmp.eq.s32.totalorder %s19, 0
    %p102 = por %p100, %p101
    %p103 = scmp.ne.s32.totalorder %s95, %s97
    %p104 = scmp.eq.s32.totalorder %s24, 1
    %p105 = por %p103, %p104
    %p106 = scmp.ne.s32.totalorder %s97, %s98
    %p107 = scmp.eq.s32.totalorder %s24, 0
    %p108 = por %p106, %p107
    %p109 = scmp.ne.s32.totalorder %s97, %s98
    %p110 = scmp.eq.s32.totalorder %s25, 1
    %p111 = por %p109, %p110
    %p113 = scmp.ne.s32.totalorder %s98, %s112
    %p114 = scmp.eq.s32.totalorder %s25, 0
    %p115 = por %p113, %p114
    %s117 = sadd.s32 %s116, 1
    %p120 = scmp.eq.s32.totalorder %s19, 1
    %p121 = scmp.ne.s32.totalorder %s116, %s118
    %p122 = scmp.eq.s32.totalorder %s19, 0
    %p123 = por %p121, %p122
    %p124 = scmp.ne.s32.totalorder %s116, %s118
    %p125 = scmp.eq.s32.totalorder %s24, 1
    %p126 = por %p124, %p125
    %p127 = scmp.ne.s32.totalorder %s118, %s119
    %p128 = scmp.eq.s32.totalorder %s24, 0
    %p129 = por %p127, %p128
    %p130 = scmp.ne.s32.totalorder %s118, %s119
    %p131 = scmp.eq.s32.totalorder %s25, 1
    %p132 = por %p130, %p131
    %p134 = scmp.ne.s32.totalorder %s119, %s133
    %p135 = scmp.eq.s32.totalorder %s25, 0
    %p136 = por %p134, %p135
    %s138 = sadd.s32 %s137, 1
    %p141 = scmp.eq.s32.totalorder %s19, 1
    %p142 = scmp.ne.s32.totalorder %s137, %s139
    %p143 = scmp.eq.s32.totalorder %s19, 0
    %p144 = por %p142, %p143
    %p145 = scmp.ne.s32.totalorder %s137, %s139
    %p146 = scmp.eq.s32.totalorder %s24, 1
    %p147 = por %p145, %p146
    %p148 = scmp.ne.s32.totalorder %s139, %s140
    %p149 = scmp.eq.s32.totalorder %s24, 0
    %p150 = por %p148, %p149
    %p151 = scmp.ne.s32.totalorder %s139, %s140
    %p152 = scmp.eq.s32.totalorder %s25, 1
    %p153 = por %p151, %p152
    %p155 = scmp.ne.s32.totalorder %s140, %s154
    %p156 = scmp.eq.s32.totalorder %s25, 0
    %p157 = por %p155, %p156
    %s159 = sadd.s32 %s158, 1
    %p162 = scmp.eq.s32.totalorder %s19, 1
    %p163 = scmp.ne.s32.totalorder %s158, %s160
    %p164 = scmp.eq.s32.totalorder %s19, 0
    %p165 = por %p163, %p164
    %p166 = scmp.ne.s32.totalorder %s158, %s160
    %p167 = scmp.eq.s32.totalorder %s24, 1
    %p168 = por %p166, %p167
    %p169 = scmp.ne.s32.totalorder %s160, %s161
    %p170 = scmp.eq.s32.totalorder %s24, 0
    %p171 = por %p169, %p170
    %p172 = scmp.ne.s32.totalorder %s160, %s161
    %p173 = scmp.eq.s32.totalorder %s25, 1
    %p174 = por %p172, %p173
    %p176 = scmp.ne.s32.totalorder %s161, %s175
    %p177 = scmp.eq.s32.totalorder %s25, 0
    %p178 = por %p176, %p177
    %s180 = sadd.s32 %s179, 1
    %p183 = scmp.eq.s32.totalorder %s19, 1
    %p184 = scmp.ne.s32.totalorder %s179, %s181
    %p185 = scmp.eq.s32.totalorder %s19, 0
    %p186 = por %p184, %p185
    %p187 = scmp.ne.s32.totalorder %s179, %s181
    %p188 = scmp.eq.s32.totalorder %s24, 1
    %p189 = por %p187, %p188
    %p190 = scmp.ne.s32.totalorder %s181, %s182
    %p191 = scmp.eq.s32.totalorder %s24, 0
    %p192 = por %p190, %p191
    %p193 = scmp.ne.s32.totalorder %s181, %s182
    %p194 = scmp.eq.s32.totalorder %s25, 1
    %p195 = por %p193, %p194
    %p197 = scmp.ne.s32.totalorder %s182, %s196
    %p198 = scmp.eq.s32.totalorder %s25, 0
    %p199 = por %p197, %p198
    %s201 = sadd.s32 %s200, 1
    %p204 = scmp.eq.s32.totalorder %s19, 1
    %p205 = scmp.ne.s32.totalorder %s200, %s202
    %p206 = scmp.eq.s32.totalorder %s19, 0
    %p207 = por %p205, %p206
    %p208 = scmp.ne.s32.totalorder %s200, %s202
    %p209 = scmp.eq.s32.totalorder %s24, 1
    %p210 = por %p208, %p209
    %p211 = scmp.ne.s32.totalorder %s202, %s203
    %p212 = scmp.eq.s32.totalorder %s24, 0
    %p213 = por %p211, %p212
    %p214 = scmp.ne.s32.totalorder %s202, %s203
    %p215 = scmp.eq.s32.totalorder %s25, 1
    %p216 = por %p214, %p215
    %p218 = scmp.ne.s32.totalorder %s203, %s217
    %p219 = scmp.eq.s32.totalorder %s25, 0
    %p220 = por %p218, %p219
    %s222 = sadd.s32 %s221, 1
    %p225 = scmp.eq.s32.totalorder %s19, 1
    %p226 = scmp.ne.s32.totalorder %s221, %s223
    %p227 = scmp.eq.s32.totalorder %s19, 0
    %p228 = por %p226, %p227
    %p229 = scmp.ne.s32.totalorder %s221, %s223
    %p230 = scmp.eq.s32.totalorder %s24, 1
    %p231 = por %p229, %p230
    %p232 = scmp.ne.s32.totalorder %s223, %s224
    %p233 = scmp.eq.s32.totalorder %s24, 0
    %p234 = por %p232, %p233
    %p235 = scmp.ne.s32.totalorder %s223, %s224
    %p236 = scmp.eq.s32.totalorder %s25, 1
    %p237 = por %p235, %p236
    %p239 = scmp.ne.s32.totalorder %s224, %s238
    %p240 = scmp.eq.s32.totalorder %s25, 0
    %p241 = por %p239, %p240
    %s243 = sadd.s32 %s242, 1
    %p246 = scmp.eq.s32.totalorder %s19, 1
    %p247 = scmp.ne.s32.totalorder %s242, %s244
    %p248 = scmp.eq.s32.totalorder %s19, 0
    %p249 = por %p247, %p248
    %p250 = scmp.ne.s32.totalorder %s242, %s244
    %p251 = scmp.eq.s32.totalorder %s24, 1
    %p252 = por %p250, %p251
    %p253 = scmp.ne.s32.totalorder %s244, %s245
    %p254 = scmp.eq.s32.totalorder %s24, 0
    %p255 = por %p253, %p254
    %p256 = scmp.ne.s32.totalorder %s244, %s245
    %p257 = scmp.eq.s32.totalorder %s25, 1
    %p258 = por %p256, %p257
    %p260 = scmp.ne.s32.totalorder %s245, %s259
    %p261 = scmp.eq.s32.totalorder %s25, 0
    %p262 = por %p260, %p261
    %s263 = ssub.s32 %s19, %s26
    %p264 = scmp.eq.s32.totalorder %s263, 0
    %s266 = sadd.s32 %s265, 1
    %s267 = scalar_select %p264, %s265, %s266
    %p270 = pneg %p264
    %p271 = scmp.eq.s32.totalorder %s19, 1
    %p272 = por %p270, %p271
    %p273 = scmp.ne.s32.totalorder %s265, %s268
    %p274 = scmp.eq.s32.totalorder %s19, 0
    %p275 = por %p273, %p274
    %p276 = scmp.ne.s32.totalorder %s265, %s268
    %p277 = scmp.eq.s32.totalorder %s24, 1
    %p278 = por %p276, %p277
    %p279 = scmp.ne.s32.totalorder %s268, %s269
    %p280 = scmp.eq.s32.totalorder %s24, 0
    %p281 = por %p279, %p280
    %p282 = scmp.ne.s32.totalorder %s268, %s269
    %p283 = scmp.eq.s32.totalorder %s25, 1
    %p284 = por %p282, %p283
    %p286 = scmp.ne.s32.totalorder %s269, %s285
    %p287 = scmp.eq.s32.totalorder %s25, 0
    %p288 = por %p286, %p287
    %s289 = ssub.s32 %s19, %s26
    %p290 = scmp.eq.s32.totalorder %s289, 0
    %s292 = sadd.s32 %s291, 1
    %s293 = scalar_select %p290, %s291, %s292
    %p296 = pneg %p290
    %p297 = scmp.eq.s32.totalorder %s19, 1
    %p298 = por %p296, %p297
    %p299 = scmp.ne.s32.totalorder %s291, %s294
    %p300 = scmp.eq.s32.totalorder %s19, 0
    %p301 = por %p299, %p300
    %p302 = scmp.ne.s32.totalorder %s291, %s294
    %p303 = scmp.eq.s32.totalorder %s24, 1
    %p304 = por %p302, %p303
    %p305 = scmp.ne.s32.totalorder %s294, %s295
    %p306 = scmp.eq.s32.totalorder %s24, 0
    %p307 = por %p305, %p306
    %p308 = scmp.ne.s32.totalorder %s294, %s295
    %p309 = scmp.eq.s32.totalorder %s25, 1
    %p310 = por %p308, %p309
    %p312 = scmp.ne.s32.totalorder %s295, %s311
    %p313 = scmp.eq.s32.totalorder %s25, 0
    %p314 = por %p312, %p313
    %p315 = scmp.le.s32.totalorder 1, %s19
    %p316 = scmp.lt.s32.totalorder %s19, 3
    %p317 = pnand %p315, %p316
    %p318 = pneg %p317
    // Predicated region
    $region9: #{cnn_scatter_forward.1} parent=5 // pred_check
      _
    $region10: #{cnn_scatter_forward.1} parent=5 // pred_check_branch
      %320 = sbr.rel (%p317) target = $region12
    $region11: #{cnn_scatter_forward.1} parent=5 // pred_region
      %s321 = ssub.s32 %s19, 1
      // Predicated region
      $region13: #{cnn_scatter_forward.1} parent=11 // pred_check
        %p322 = pneg %p66
      $region14: #{cnn_scatter_forward.1} parent=11 // pred_check_branch
        %324 = sbr.rel (%p322) target = $region16
      $region15: #{cnn_scatter_forward.1} parent=11 // pred_region
        _
      $region16: #{cnn_scatter_forward.1} parent=11 // pred_fallthru
        _
      // Predicated region
      $region17: #{cnn_scatter_forward.1} parent=11 // pred_check
        %p325 = pneg %p87
      $region18: #{cnn_scatter_forward.1} parent=11 // pred_check_branch
        %327 = sbr.rel (%p325) target = $region20
      $region19: #{cnn_scatter_forward.1} parent=11 // pred_region
        _
      $region20: #{cnn_scatter_forward.1} parent=11 // pred_fallthru
        _
      // Predicated region
      $region21: #{cnn_scatter_forward.1} parent=11 // pred_check
        %p328 = pneg %p108
      $region22: #{cnn_scatter_forward.1} parent=11 // pred_check_branch
        %330 = sbr.rel (%p328) target = $region24
      $region23: #{cnn_scatter_forward.1} parent=11 // pred_region
        _
      $region24: #{cnn_scatter_forward.1} parent=11 // pred_fallthru
        _
      // Predicated region
      $region25: #{cnn_scatter_forward.1} parent=11 // pred_check
        %p331 = pneg %p129
      $region26: #{cnn_scatter_forward.1} parent=11 // pred_check_branch
        %333 = sbr.rel (%p331) target = $region28
      $region27: #{cnn_scatter_forward.1} parent=11 // pred_region
        _
      $region28: #{cnn_scatter_forward.1} parent=11 // pred_fallthru
        _
      // Predicated region
      $region29: #{cnn_scatter_forward.1} parent=11 // pred_check
        %p334 = pneg %p150
      $region30: #{cnn_scatter_forward.1} parent=11 // pred_check_branch
        %336 = sbr.rel (%p334) target = $region32
      $region31: #{cnn_scatter_forward.1} parent=11 // pred_region
        _
      $region32: #{cnn_scatter_forward.1} parent=11 // pred_fallthru
        _
      // Predicated region
      $region33: #{cnn_scatter_forward.1} parent=11 // pred_check
        %p337 = pneg %p171
      $region34: #{cnn_scatter_forward.1} parent=11 // pred_check_branch
        %339 = sbr.rel (%p337) target = $region36
      $region35: #{cnn_scatter_forward.1} parent=11 // pred_region
        _
      $region36: #{cnn_scatter_forward.1} parent=11 // pred_fallthru
        _
      // Predicated region
      $region37: #{cnn_scatter_forward.1} parent=11 // pred_check
        %p340 = pneg %p192
      $region38: #{cnn_scatter_forward.1} parent=11 // pred_check_branch
        %342 = sbr.rel (%p340) target = $region40
      $region39: #{cnn_scatter_forward.1} parent=11 // pred_region
        _
      $region40: #{cnn_scatter_forward.1} parent=11 // pred_fallthru
        _
      // Predicated region
      $region41: #{cnn_scatter_forward.1} parent=11 // pred_check
        %p343 = pneg %p213
      $region42: #{cnn_scatter_forward.1} parent=11 // pred_check_branch
        %345 = sbr.rel (%p343) target = $region44
      $region43: #{cnn_scatter_forward.1} parent=11 // pred_region
        _
      $region44: #{cnn_scatter_forward.1} parent=11 // pred_fallthru
        _
      // Predicated region
      $region45: #{cnn_scatter_forward.1} parent=11 // pred_check
        %p346 = pneg %p234
      $region46: #{cnn_scatter_forward.1} parent=11 // pred_check_branch
        %348 = sbr.rel (%p346) target = $region48
      $region47: #{cnn_scatter_forward.1} parent=11 // pred_region
        _
      $region48: #{cnn_scatter_forward.1} parent=11 // pred_fallthru
        _
      // Predicated region
      $region49: #{cnn_scatter_forward.1} parent=11 // pred_check
        %p349 = pneg %p255
      $region50: #{cnn_scatter_forward.1} parent=11 // pred_check_branch
        %351 = sbr.rel (%p349) target = $region52
      $region51: #{cnn_scatter_forward.1} parent=11 // pred_region
        _
      $region52: #{cnn_scatter_forward.1} parent=11 // pred_fallthru
        _
    $region12: #{cnn_scatter_forward.1} parent=5 // pred_fallthru
      _
    %p352 = scmp.lt.s32.totalorder %s19, 2
    // Predicated region
    $region53: #{cnn_scatter_forward.1} parent=5 // pred_check
      %p353 = pneg %p352
    $region54: #{cnn_scatter_forward.1} parent=5 // pred_check_branch
      %355 = sbr.rel (%p353) target = $region56
    $region55: #{cnn_scatter_forward.1} parent=5 // pred_region
      // Predicated region
      $region57: #{cnn_scatter_forward.1} parent=55 // pred_check
        %p356 = pneg %p39
      $region58: #{cnn_scatter_forward.1} parent=55 // pred_check_branch
        %358 = sbr.rel (%p356) target = $region60
      $region59: #{cnn_scatter_forward.1} parent=55 // pred_region
        %p359 = scmp.lt.s32.totalorder %s19, 1
        %s360 = scalar_select %p359, %s19, 1
        %s361 = smul.addr %s360, 4
        %s362 = scalar_lea.vmem %s0, %s361
      $region60: #{cnn_scatter_forward.1} parent=55 // pred_fallthru
        _
    $region56: #{cnn_scatter_forward.1} parent=5 // pred_fallthru
      _
    %p363 = scmp.le.s32.totalorder 1, %s19
    %p364 = scmp.lt.s32.totalorder %s19, 3
    %p365 = pnand %p363, %p364
    %p366 = pneg %p365
    // Predicated region
    $region61: #{cnn_scatter_forward.1} parent=5 // pred_check
      _
    $region62: #{cnn_scatter_forward.1} parent=5 // pred_check_branch
      %368 = sbr.rel (%p365) target = $region64
    $region63: #{cnn_scatter_forward.1} parent=5 // pred_region
      %s369 = ssub.s32 %s19, 1
      %p370 = scmp.lt.s32.totalorder %s24, 1
      %s371 = scalar_select %p370, %s24, 1
      %s372 = smul.addr %s371, 4
      %s373 = scalar_lea.vmem %s0, %s372
      %p374 = pneg %p45
      %p375 = pneg %p42
      %p376 = pneg %p66
      %p377 = pneg %p63
      %p378 = pneg %p87
      %p379 = pneg %p84
      %p380 = pneg %p108
      %p381 = pneg %p105
      %p382 = pneg %p129
      %p383 = pneg %p126
      %p384 = pneg %p150
      %p385 = pneg %p147
      %p386 = pneg %p171
      %p387 = pneg %p168
      %p388 = pneg %p192
      %p389 = pneg %p189
      %p390 = pneg %p213
      %p391 = pneg %p210
      %p392 = pneg %p234
      %p393 = pneg %p231
      %p394 = pneg %p255
      %p395 = pneg %p252
      %p396 = pneg %p281
      %p397 = pneg %p278
      %p398 = scmp.lt.s32.totalorder %s24, 1
      %s399 = scalar_select %p398, %s24, 1
      %s400 = smul.addr %s399, 2
      %s401 = smul.addr %s400, 8
      %s402 = scalar_lea.vmem %s11, %s401
      %p403 = pneg %p307
      %p404 = pneg %p304
      %p405 = scmp.lt.s32.totalorder %s24, 1
      %s406 = scalar_select %p405, %s24, 1
      %s407 = smul.addr %s406, 4
      %s408 = scalar_lea.vmem %s12, %s407
      %p409 = scmp.lt.s32.totalorder %s24, 1
      %s410 = scalar_select %p409, %s24, 1
      %s411 = smul.addr %s410, 4
      %s412 = scalar_lea.vmem %s0, %s411
      %p413 = scmp.lt.s32.totalorder %s24, 1
      %s414 = scalar_select %p413, %s24, 1
      %s415 = smul.addr %s414, 2
      %s416 = smul.addr %s415, 8
      %s417 = scalar_lea.vmem %s11, %s416
      %p418 = scmp.lt.s32.totalorder %s24, 1
      %s419 = scalar_select %p418, %s24, 1
      %s420 = smul.addr %s419, 4
      %s421 = scalar_lea.vmem %s12, %s420
      %v422 = vld [vmem:[%s412] sm:$0xf]
      %v423 = vld [vmem:[%s2] sm:$0xff]
      %v424 = vld [vmem:[%s2 + $0x8] sm:$0xff]
      %426 = vset.pattern.permute.xlu0 0
      %427 = vperm.xlu0 %426, %v423
      %v428 = vpop.permute.xlu0 %427
      %431 = vset.pattern.permute.xlu0 0
      %432 = vperm.xlu0 %431, %v424
      %v433 = vpop.permute.xlu0 %432
      %v436 = vperm.slane %v422, 0
      %v437 = vperm.slane %v422, 1
      %v438 = vperm.slane %v422, 2
      %v439 = vperm.slane %v422, 3
      %v444 = vmul.f32 %v428, %v436
      %v445 = vmul.f32 %v428, %v437
      %v446 = vmul.f32 %v428, %v438
      %v447 = vmul.f32 %v428, %v439
      %v448 = vmul.f32 %v433, %v436
      %v449 = vmul.f32 %v433, %v437
      %v450 = vmul.f32 %v433, %v438
      %v451 = vmul.f32 %v433, %v439
      %v452 = vadd.f32 %v444, 0.0
      %v453 = vadd.f32 %v445, 0.0
      %v454 = vadd.f32 %v446, 0.0
      %v455 = vadd.f32 %v447, 0.0
      %v456 = vadd.f32 %v448, 0.0
      %v457 = vadd.f32 %v449, 0.0
      %v458 = vadd.f32 %v450, 0.0
      %v459 = vadd.f32 %v451, 0.0
      %460 = vset.pattern.permute.xlu0 1
      %461 = vperm.xlu0 %460, %v423
      %v462 = vpop.permute.xlu0 %461
      %464 = vset.pattern.permute.xlu0 1
      %465 = vperm.xlu0 %464, %v424
      %v466 = vpop.permute.xlu0 %465
      %v468 = vmul.f32 %v462, %v436
      %v469 = vmul.f32 %v462, %v437
      %v470 = vmul.f32 %v462, %v438
      %v471 = vmul.f32 %v462, %v439
      %v472 = vmul.f32 %v466, %v436
      %v473 = vmul.f32 %v466, %v437
      %v474 = vmul.f32 %v466, %v438
      %v475 = vmul.f32 %v466, %v439
      %484 = vrot.lane.b32.xlu0 %v468, 127
      %v485 = vpop.permute.xlu0 %484
      %486 = vrot.lane.b32.xlu0 %v469, 127
      %v487 = vpop.permute.xlu0 %486
      %488 = vrot.lane.b32.xlu0 %v470, 127
      %v489 = vpop.permute.xlu0 %488
      %490 = vrot.lane.b32.xlu0 %v471, 127
      %v491 = vpop.permute.xlu0 %490
      %492 = vrot.lane.b32.xlu0 %v472, 127
      %v493 = vpop.permute.xlu0 %492
      %494 = vrot.lane.b32.xlu0 %v473, 127
      %v495 = vpop.permute.xlu0 %494
      %496 = vrot.lane.b32.xlu0 %v474, 127
      %v497 = vpop.permute.xlu0 %496
      %498 = vrot.lane.b32.xlu0 %v475, 127
      %v499 = vpop.permute.xlu0 %498
      %vm500 = vcmask 1039360
      %v501 = vsel %vm500, %v485, %v487
      %v502 = vsel %vm500, %v487, %v489
      %v503 = vsel %vm500, %v489, %v491
      %v504 = vsel %vm500, %v493, %v495
      %v505 = vsel %vm500, %v495, %v497
      %v506 = vsel %vm500, %v497, %v499
      %v515 = vadd.f32 %v452, %v501
      %v516 = vadd.f32 %v453, %v502
      %v517 = vadd.f32 %v454, %v503
      %v518 = vadd.f32 %v455, %v491
      %v519 = vadd.f32 %v456, %v504
      %v520 = vadd.f32 %v457, %v505
      %v521 = vadd.f32 %v458, %v506
      %v522 = vadd.f32 %v459, %v499
      %523 = vset.pattern.permute.xlu0 2
      %524 = vperm.xlu0 %523, %v423
      %v525 = vpop.permute.xlu0 %524
      %527 = vset.pattern.permute.xlu0 2
      %528 = vperm.xlu0 %527, %v424
      %v529 = vpop.permute.xlu0 %528
      %v531 = vmul.f32 %v525, %v436
      %v532 = vmul.f32 %v525, %v437
      %v533 = vmul.f32 %v525, %v438
      %v534 = vmul.f32 %v525, %v439
      %v535 = vmul.f32 %v529, %v436
      %v536 = vmul.f32 %v529, %v437
      %v537 = vmul.f32 %v529, %v438
      %v538 = vmul.f32 %v529, %v439
      %547 = vrot.lane.b32.xlu0 %v531, 126
      %v548 = vpop.permute.xlu0 %547
      %549 = vrot.lane.b32.xlu0 %v532, 126
      %v550 = vpop.permute.xlu0 %549
      %551 = vrot.lane.b32.xlu0 %v533, 126
      %v552 = vpop.permute.xlu0 %551
      %553 = vrot.lane.b32.xlu0 %v534, 126
      %v554 = vpop.permute.xlu0 %553
      %555 = vrot.lane.b32.xlu0 %v535, 126
      %v556 = vpop.permute.xlu0 %555
      %557 = vrot.lane.b32.xlu0 %v536, 126
      %v558 = vpop.permute.xlu0 %557
      %559 = vrot.lane.b32.xlu0 %v537, 126
      %v560 = vpop.permute.xlu0 %559
      %561 = vrot.lane.b32.xlu0 %v538, 126
      %v562 = vpop.permute.xlu0 %561
      %vm563 = vcmask 1031168
      %v564 = vsel %vm563, %v548, %v550
      %v565 = vsel %vm563, %v550, %v552
      %v566 = vsel %vm563, %v552, %v554
      %v567 = vsel %vm563, %v556, %v558
      %v568 = vsel %vm563, %v558, %v560
      %v569 = vsel %vm563, %v560, %v562
      %v578 = vadd.f32 %v515, %v564
      %v579 = vadd.f32 %v516, %v565
      %v580 = vadd.f32 %v517, %v566
      %v581 = vadd.f32 %v518, %v554
      %v582 = vadd.f32 %v519, %v567
      %v583 = vadd.f32 %v520, %v568
      %v584 = vadd.f32 %v521, %v569
      %v585 = vadd.f32 %v522, %v562
      %586 = vset.pattern.permute.xlu0 3
      %587 = vperm.xlu0 %586, %v423
      %v588 = vpop.permute.xlu0 %587
      %590 = vset.pattern.permute.xlu0 3
      %591 = vperm.xlu0 %590, %v424
      %v592 = vpop.permute.xlu0 %591
      %v594 = vmul.f32 %v588, %v436
      %v595 = vmul.f32 %v588, %v437
      %v596 = vmul.f32 %v588, %v438
      %v597 = vmul.f32 %v588, %v439
      %v598 = vmul.f32 %v592, %v436
      %v599 = vmul.f32 %v592, %v437
      %v600 = vmul.f32 %v592, %v438
      %v601 = vmul.f32 %v592, %v439
      %610 = vrot.lane.b32.xlu0 %v594, 106
      %v611 = vpop.permute.xlu0 %610
      %612 = vrot.lane.b32.xlu0 %v595, 106
      %v613 = vpop.permute.xlu0 %612
      %614 = vrot.lane.b32.xlu0 %v596, 106
      %v615 = vpop.permute.xlu0 %614
      %616 = vrot.lane.b32.xlu0 %v597, 106
      %v617 = vpop.permute.xlu0 %616
      %618 = vrot.lane.b32.xlu0 %v598, 106
      %v619 = vpop.permute.xlu0 %618
      %620 = vrot.lane.b32.xlu0 %v599, 106
      %v621 = vpop.permute.xlu0 %620
      %622 = vrot.lane.b32.xlu0 %v600, 106
      %v623 = vpop.permute.xlu0 %622
      %624 = vrot.lane.b32.xlu0 %v601, 106
      %v625 = vpop.permute.xlu0 %624
      %vm626 = vcmask 867328
      %v627 = vsel %vm626, %v611, %v613
      %v628 = vsel %vm626, %v613, %v615
      %v629 = vsel %vm626, %v615, %v617
      %v630 = vsel %vm626, %v619, %v621
      %v631 = vsel %vm626, %v621, %v623
      %v632 = vsel %vm626, %v623, %v625
      %v641 = vadd.f32 %v578, %v627
      %v642 = vadd.f32 %v579, %v628
      %v643 = vadd.f32 %v580, %v629
      %v644 = vadd.f32 %v581, %v617
      %v645 = vadd.f32 %v582, %v630
      %v646 = vadd.f32 %v583, %v631
      %v647 = vadd.f32 %v584, %v632
      %v648 = vadd.f32 %v585, %v625
      %649 = vset.pattern.permute.xlu0 4
      %650 = vperm.xlu0 %649, %v423
      %v651 = vpop.permute.xlu0 %650
      %653 = vset.pattern.permute.xlu0 4
      %654 = vperm.xlu0 %653, %v424
      %v655 = vpop.permute.xlu0 %654
      %v657 = vmul.f32 %v651, %v436
      %v658 = vmul.f32 %v651, %v437
      %v659 = vmul.f32 %v651, %v438
      %v660 = vmul.f32 %v651, %v439
      %v661 = vmul.f32 %v655, %v436
      %v662 = vmul.f32 %v655, %v437
      %v663 = vmul.f32 %v655, %v438
      %v664 = vmul.f32 %v655, %v439
      %673 = vrot.lane.b32.xlu0 %v657, 105
      %v674 = vpop.permute.xlu0 %673
      %675 = vrot.lane.b32.xlu0 %v658, 105
      %v676 = vpop.permute.xlu0 %675
      %677 = vrot.lane.b32.xlu0 %v659, 105
      %v678 = vpop.permute.xlu0 %677
      %679 = vrot.lane.b32.xlu0 %v660, 105
      %v680 = vpop.permute.xlu0 %679
      %681 = vrot.lane.b32.xlu0 %v661, 105
      %v682 = vpop.permute.xlu0 %681
      %683 = vrot.lane.b32.xlu0 %v662, 105
      %v684 = vpop.permute.xlu0 %683
      %685 = vrot.lane.b32.xlu0 %v663, 105
      %v686 = vpop.permute.xlu0 %685
      %687 = vrot.lane.b32.xlu0 %v664, 105
      %v688 = vpop.permute.xlu0 %687
      %vm689 = vcmask 859136
      %v690 = vsel %vm689, %v674, %v676
      %v691 = vsel %vm689, %v676, %v678
      %v692 = vsel %vm689, %v678, %v680
      %v693 = vsel %vm689, %v682, %v684
      %v694 = vsel %vm689, %v684, %v686
      %v695 = vsel %vm689, %v686, %v688
      %v704 = vadd.f32 %v641, %v690
      %v705 = vadd.f32 %v642, %v691
      %v706 = vadd.f32 %v643, %v692
      %v707 = vadd.f32 %v644, %v680
      %v708 = vadd.f32 %v645, %v693
      %v709 = vadd.f32 %v646, %v694
      %v710 = vadd.f32 %v647, %v695
      %v711 = vadd.f32 %v648, %v688
      %712 = vset.pattern.permute.xlu0 5
      %713 = vperm.xlu0 %712, %v423
      %v714 = vpop.permute.xlu0 %713
      %716 = vset.pattern.permute.xlu0 5
      %717 = vperm.xlu0 %716, %v424
      %v718 = vpop.permute.xlu0 %717
      %v720 = vmul.f32 %v714, %v436
      %v721 = vmul.f32 %v714, %v437
      %v722 = vmul.f32 %v714, %v438
      %v723 = vmul.f32 %v714, %v439
      %v724 = vmul.f32 %v718, %v436
      %v725 = vmul.f32 %v718, %v437
      %v726 = vmul.f32 %v718, %v438
      %v727 = vmul.f32 %v718, %v439
      %736 = vrot.lane.b32.xlu0 %v720, 104
      %v737 = vpop.permute.xlu0 %736
      %738 = vrot.lane.b32.xlu0 %v721, 104
      %v739 = vpop.permute.xlu0 %738
      %740 = vrot.lane.b32.xlu0 %v722, 104
      %v741 = vpop.permute.xlu0 %740
      %742 = vrot.lane.b32.xlu0 %v723, 104
      %v743 = vpop.permute.xlu0 %742
      %744 = vrot.lane.b32.xlu0 %v724, 104
      %v745 = vpop.permute.xlu0 %744
      %746 = vrot.lane.b32.xlu0 %v725, 104
      %v747 = vpop.permute.xlu0 %746
      %748 = vrot.lane.b32.xlu0 %v726, 104
      %v749 = vpop.permute.xlu0 %748
      %750 = vrot.lane.b32.xlu0 %v727, 104
      %v751 = vpop.permute.xlu0 %750
      %vm752 = vcmask 850944
      %v753 = vsel %vm752, %v737, %v739
      %v754 = vsel %vm752, %v739, %v741
      %v755 = vsel %vm752, %v741, %v743
      %v756 = vsel %vm752, %v745, %v747
      %v757 = vsel %vm752, %v747, %v749
      %v758 = vsel %vm752, %v749, %v751
      %v767 = vadd.f32 %v704, %v753
      %v768 = vadd.f32 %v705, %v754
      %v769 = vadd.f32 %v706, %v755
      %v770 = vadd.f32 %v707, %v743
      %v771 = vadd.f32 %v708, %v756
      %v772 = vadd.f32 %v709, %v757
      %v773 = vadd.f32 %v710, %v758
      %v774 = vadd.f32 %v711, %v751
      %775 = vset.pattern.permute.xlu0 6
      %776 = vperm.xlu0 %775, %v423
      %v777 = vpop.permute.xlu0 %776
      %779 = vset.pattern.permute.xlu0 6
      %780 = vperm.xlu0 %779, %v424
      %v781 = vpop.permute.xlu0 %780
      %v783 = vmul.f32 %v777, %v436
      %v784 = vmul.f32 %v777, %v437
      %v785 = vmul.f32 %v777, %v438
      %v786 = vmul.f32 %v777, %v439
      %v787 = vmul.f32 %v781, %v436
      %v788 = vmul.f32 %v781, %v437
      %v789 = vmul.f32 %v781, %v438
      %v790 = vmul.f32 %v781, %v439
      %799 = vrot.lane.b32.xlu0 %v783, 84
      %v800 = vpop.permute.xlu0 %799
      %801 = vrot.lane.b32.xlu0 %v784, 84
      %v802 = vpop.permute.xlu0 %801
      %803 = vrot.lane.b32.xlu0 %v785, 84
      %v804 = vpop.permute.xlu0 %803
      %805 = vrot.lane.b32.xlu0 %v786, 84
      %v806 = vpop.permute.xlu0 %805
      %807 = vrot.lane.b32.xlu0 %v787, 84
      %v808 = vpop.permute.xlu0 %807
      %809 = vrot.lane.b32.xlu0 %v788, 84
      %v810 = vpop.permute.xlu0 %809
      %811 = vrot.lane.b32.xlu0 %v789, 84
      %v812 = vpop.permute.xlu0 %811
      %813 = vrot.lane.b32.xlu0 %v790, 84
      %v814 = vpop.permute.xlu0 %813
      %vm815 = vcmask 687104
      %v816 = vsel %vm815, %v800, %v802
      %v817 = vsel %vm815, %v802, %v804
      %v818 = vsel %vm815, %v804, %v806
      %v819 = vsel %vm815, %v808, %v810
      %v820 = vsel %vm815, %v810, %v812
      %v821 = vsel %vm815, %v812, %v814
      %v830 = vadd.f32 %v767, %v816
      %v831 = vadd.f32 %v768, %v817
      %v832 = vadd.f32 %v769, %v818
      %v833 = vadd.f32 %v770, %v806
      %v834 = vadd.f32 %v771, %v819
      %v835 = vadd.f32 %v772, %v820
      %v836 = vadd.f32 %v773, %v821
      %v837 = vadd.f32 %v774, %v814
      %838 = vset.pattern.permute.xlu0 7
      %839 = vperm.xlu0 %838, %v423
      %v840 = vpop.permute.xlu0 %839
      %842 = vset.pattern.permute.xlu0 7
      %843 = vperm.xlu0 %842, %v424
      %v844 = vpop.permute.xlu0 %843
      %v846 = vmul.f32 %v840, %v436
      %v847 = vmul.f32 %v840, %v437
      %v848 = vmul.f32 %v840, %v438
      %v849 = vmul.f32 %v840, %v439
      %v850 = vmul.f32 %v844, %v436
      %v851 = vmul.f32 %v844, %v437
      %v852 = vmul.f32 %v844, %v438
      %v853 = vmul.f32 %v844, %v439
      %862 = vrot.lane.b32.xlu0 %v846, 83
      %v863 = vpop.permute.xlu0 %862
      %864 = vrot.lane.b32.xlu0 %v847, 83
      %v865 = vpop.permute.xlu0 %864
      %866 = vrot.lane.b32.xlu0 %v848, 83
      %v867 = vpop.permute.xlu0 %866
      %868 = vrot.lane.b32.xlu0 %v849, 83
      %v869 = vpop.permute.xlu0 %868
      %870 = vrot.lane.b32.xlu0 %v850, 83
      %v871 = vpop.permute.xlu0 %870
      %872 = vrot.lane.b32.xlu0 %v851, 83
      %v873 = vpop.permute.xlu0 %872
      %874 = vrot.lane.b32.xlu0 %v852, 83
      %v875 = vpop.permute.xlu0 %874
      %876 = vrot.lane.b32.xlu0 %v853, 83
      %v877 = vpop.permute.xlu0 %876
      %vm878 = vcmask 678912
      %v879 = vsel %vm878, %v863, %v865
      %v880 = vsel %vm878, %v865, %v867
      %v881 = vsel %vm878, %v867, %v869
      %v882 = vsel %vm878, %v871, %v873
      %v883 = vsel %vm878, %v873, %v875
      %v884 = vsel %vm878, %v875, %v877
      %v893 = vadd.f32 %v830, %v879
      %v894 = vadd.f32 %v831, %v880
      %v895 = vadd.f32 %v832, %v881
      %v896 = vadd.f32 %v833, %v869
      %v897 = vadd.f32 %v834, %v882
      %v898 = vadd.f32 %v835, %v883
      %v899 = vadd.f32 %v836, %v884
      %v900 = vadd.f32 %v837, %v877
      %901 = vset.pattern.permute.xlu0 8
      %902 = vperm.xlu0 %901, %v423
      %v903 = vpop.permute.xlu0 %902
      %905 = vset.pattern.permute.xlu0 8
      %906 = vperm.xlu0 %905, %v424
      %v907 = vpop.permute.xlu0 %906
      %v909 = vmul.f32 %v903, %v436
      %v910 = vmul.f32 %v903, %v437
      %v911 = vmul.f32 %v903, %v438
      %v912 = vmul.f32 %v903, %v439
      %v913 = vmul.f32 %v907, %v436
      %v914 = vmul.f32 %v907, %v437
      %v915 = vmul.f32 %v907, %v438
      %v916 = vmul.f32 %v907, %v439
      %925 = vrot.lane.b32.xlu0 %v909, 82
      %v926 = vpop.permute.xlu0 %925
      %927 = vrot.lane.b32.xlu0 %v910, 82
      %v928 = vpop.permute.xlu0 %927
      %929 = vrot.lane.b32.xlu0 %v911, 82
      %v930 = vpop.permute.xlu0 %929
      %931 = vrot.lane.b32.xlu0 %v912, 82
      %v932 = vpop.permute.xlu0 %931
      %933 = vrot.lane.b32.xlu0 %v913, 82
      %v934 = vpop.permute.xlu0 %933
      %935 = vrot.lane.b32.xlu0 %v914, 82
      %v936 = vpop.permute.xlu0 %935
      %937 = vrot.lane.b32.xlu0 %v915, 82
      %v938 = vpop.permute.xlu0 %937
      %939 = vrot.lane.b32.xlu0 %v916, 82
      %v940 = vpop.permute.xlu0 %939
      %vm941 = vcmask 670720
      %v942 = vsel %vm941, %v926, %v928
      %v943 = vsel %vm941, %v928, %v930
      %v944 = vsel %vm941, %v930, %v932
      %v945 = vsel %vm941, %v934, %v936
      %v946 = vsel %vm941, %v936, %v938
      %v947 = vsel %vm941, %v938, %v940
      %v956 = vadd.f32 %v893, %v942
      %v957 = vadd.f32 %v894, %v943
      %v958 = vadd.f32 %v895, %v944
      %v959 = vadd.f32 %v896, %v932
      %v960 = vadd.f32 %v897, %v945
      %v961 = vadd.f32 %v898, %v946
      %v962 = vadd.f32 %v899, %v947
      %v963 = vadd.f32 %v900, %v940
      %v964 = vld [vmem:[%s3] sm:$0xff]
      %v965 = vld [vmem:[%s3 + $0x8] sm:$0xff]
      %967 = vset.pattern.permute.xlu0 0
      %968 = vperm.xlu0 %967, %v964
      %v969 = vpop.permute.xlu0 %968
      %972 = vset.pattern.permute.xlu0 0
      %973 = vperm.xlu0 %972, %v965
      %v974 = vpop.permute.xlu0 %973
      %v976 = vadd.f32 %v956, %v969
      %v977 = vadd.f32 %v957, %v969
      %v978 = vadd.f32 %v958, %v969
      %v979 = vadd.f32 %v959, %v969
      %v980 = vadd.f32 %v960, %v974
      %v981 = vadd.f32 %v961, %v974
      %v982 = vadd.f32 %v962, %v974
      %v983 = vadd.f32 %v963, %v974
      %v984 = vmax.f32 %v976, 0.0
      %v985 = vmax.f32 %v977, 0.0
      %v986 = vmax.f32 %v978, 0.0
      %v987 = vmax.f32 %v979, 0.0
      %v988 = vmax.f32 %v980, 0.0
      %v989 = vmax.f32 %v981, 0.0
      %v990 = vmax.f32 %v982, 0.0
      %v991 = vmax.f32 %v983, 0.0
      %v992 = vld [vmem:[%s1] sm:$0xf]
      %v994 = vperm.slane %v992, 0
      %v995 = vperm.slane %v992, 1
      %v996 = vperm.slane %v992, 2
      %v997 = vperm.slane %v992, 3
      %v1002 = vmul.f32 %v984, %v994
      %v1003 = vmul.f32 %v985, %v995
      %v1004 = vmul.f32 %v986, %v996
      %v1005 = vmul.f32 %v987, %v997
      %v1006 = vmul.f32 %v988, %v994
      %v1007 = vmul.f32 %v989, %v995
      %v1008 = vmul.f32 %v990, %v996
      %v1009 = vmul.f32 %v991, %v997
      %v1010 = vld [vmem:[%s4] sm:$0xff]
      %v1011 = vld [vmem:[%s4 + $0x10] sm:$0xff]
      %v1012 = vld [vmem:[%s4 + $0x20] sm:$0xff]
      %v1013 = vld [vmem:[%s4 + $0x30] sm:$0xff]
      %1018 = vrot.lane.b32.xlu0 %v1010, 112
      %v1019 = vpop.permute.xlu0 %1018
      %1020 = vrot.lane.b32.xlu0 %v1011, 112
      %v1021 = vpop.permute.xlu0 %1020
      %1022 = vrot.lane.b32.xlu0 %v1012, 112
      %v1023 = vpop.permute.xlu0 %1022
      %1024 = vrot.lane.b32.xlu0 %v1013, 112
      %v1025 = vpop.permute.xlu0 %1024
      %1032 = vrot.lane.b32.xlu0 %v1002, 127
      %v1033 = vpop.permute.xlu0 %1032
      %1034 = vrot.lane.b32.xlu0 %v1003, 127
      %v1035 = vpop.permute.xlu0 %1034
      %1036 = vrot.lane.b32.xlu0 %v1004, 127
      %v1037 = vpop.permute.xlu0 %1036
      %1038 = vrot.lane.b32.xlu0 %v1006, 127
      %v1039 = vpop.permute.xlu0 %1038
      %1040 = vrot.lane.b32.xlu0 %v1007, 127
      %v1041 = vpop.permute.xlu0 %1040
      %1042 = vrot.lane.b32.xlu0 %v1008, 127
      %v1043 = vpop.permute.xlu0 %1042
      %v1044 = vsel %vm500, %v1033, %v1035
      %v1045 = vsel %vm500, %v1035, %v1037
      %v1046 = vsel %vm500, %v1039, %v1041
      %v1047 = vsel %vm500, %v1041, %v1043
      %vm1054 = vcmask 130048
      %v1055 = vsel %vm1054, %v1019, 0
      %v1057 = vsel %vm1054, %v1021, 0
      %v1059 = vsel %vm1054, %v1023, 0
      %v1061 = vsel %vm1054, %v1025, 0
      %1063 = vmatpush.msra.mxu0 0.0
      %1064 = vmatpush.msra.mxu0 0.0
      %1065 = vmatpush.msra.mxu0 0.0
      %1066 = vmatpush.msra.mxu0 0.0
      %1067 = vmatpush.msra.mxu0 0.0
      %1068 = vmatpush.msra.mxu0 0.0
      %1069 = vmatpush.msra.mxu0 0.0
      %1070 = vmatpush.msra.mxu0 0.0
      %1071 = vmatpush.msra.mxu0 0.0
      %1072 = vmatpush.msra.mxu0 0.0
      %1073 = vmatpush.msra.mxu0 0.0
      %1074 = vmatpush.msra.mxu0 0.0
      %1075 = vmatpush.msra.mxu0 0.0
      %1076 = vmatpush.msra.mxu0 0.0
      %1077 = vmatpush.msra.mxu0 %v1046
      %1078 = vmatpush.msra.mxu0 %v1044
      %1079 = vmatmul.f32.gmra.mxu0 %v1055
      %v1080 = vpop.f32.mrf.mxu0
      %v1081 = vadd.f32 0.0, %v1080
      %1082 = vmatmul.f32.gmra.mxu0 %v1057
      %v1083 = vpop.f32.mrf.mxu0
      %v1084 = vadd.f32 0.0, %v1083
      %1085 = vmatmul.f32.gmra.mxu0 %v1059
      %v1086 = vpop.f32.mrf.mxu0
      %v1087 = vadd.f32 0.0, %v1086
      %1088 = vmatmul.f32.gmra.mxu0 %v1061
      %v1089 = vpop.f32.mrf.mxu0
      %v1090 = vadd.f32 0.0, %v1089
      %1091 = vdwg.mxu0
      %1092 = vmatpush.msra.mxu0 0.0
      %1093 = vmatpush.msra.mxu0 0.0
      %1094 = vmatpush.msra.mxu0 0.0
      %1095 = vmatpush.msra.mxu0 0.0
      %1096 = vmatpush.msra.mxu0 0.0
      %1097 = vmatpush.msra.mxu0 0.0
      %1098 = vmatpush.msra.mxu0 0.0
      %1099 = vmatpush.msra.mxu0 0.0
      %1100 = vmatpush.msra.mxu0 0.0
      %1101 = vmatpush.msra.mxu0 0.0
      %1102 = vmatpush.msra.mxu0 0.0
      %1103 = vmatpush.msra.mxu0 0.0
      %1104 = vmatpush.msra.mxu0 0.0
      %1105 = vmatpush.msra.mxu0 0.0
      %1106 = vmatpush.msra.mxu0 %v1047
      %1107 = vmatpush.msra.mxu0 %v1045
      %1108 = vmatmul.f32.gmra.mxu0 %v1055
      %v1109 = vpop.f32.mrf.mxu0
      %v1110 = vadd.f32 0.0, %v1109
      %1111 = vmatmul.f32.gmra.mxu0 %v1057
      %v1112 = vpop.f32.mrf.mxu0
      %v1113 = vadd.f32 0.0, %v1112
      %1114 = vmatmul.f32.gmra.mxu0 %v1059
      %v1115 = vpop.f32.mrf.mxu0
      %v1116 = vadd.f32 0.0, %v1115
      %1117 = vmatmul.f32.gmra.mxu0 %v1061
      %v1118 = vpop.f32.mrf.mxu0
      %v1119 = vadd.f32 0.0, %v1118
      %1120 = vdwg.mxu0
      %1121 = vmatpush.msra.mxu0 0.0
      %1122 = vmatpush.msra.mxu0 0.0
      %1123 = vmatpush.msra.mxu0 0.0
      %1124 = vmatpush.msra.mxu0 0.0
      %1125 = vmatpush.msra.mxu0 0.0
      %1126 = vmatpush.msra.mxu0 0.0
      %1127 = vmatpush.msra.mxu0 0.0
      %1128 = vmatpush.msra.mxu0 0.0
      %1129 = vmatpush.msra.mxu0 0.0
      %1130 = vmatpush.msra.mxu0 0.0
      %1131 = vmatpush.msra.mxu0 0.0
      %1132 = vmatpush.msra.mxu0 0.0
      %1133 = vmatpush.msra.mxu0 0.0
      %1134 = vmatpush.msra.mxu0 0.0
      %1135 = vmatpush.msra.mxu0 %v1043
      %1136 = vmatpush.msra.mxu0 %v1037
      %1137 = vmatmul.f32.gmra.mxu0 %v1055
      %v1138 = vpop.f32.mrf.mxu0
      %v1139 = vadd.f32 0.0, %v1138
      %1140 = vmatmul.f32.gmra.mxu0 %v1057
      %v1141 = vpop.f32.mrf.mxu0
      %v1142 = vadd.f32 0.0, %v1141
      %1143 = vmatmul.f32.gmra.mxu0 %v1059
      %v1144 = vpop.f32.mrf.mxu0
      %v1145 = vadd.f32 0.0, %v1144
      %1146 = vmatmul.f32.gmra.mxu0 %v1061
      %v1147 = vpop.f32.mrf.mxu0
      %v1148 = vadd.f32 0.0, %v1147
      %1149 = vdwg.mxu0
      %v1150 = vsel %vm1054, %v1010, 0
      %v1152 = vsel %vm1054, %v1011, 0
      %v1154 = vsel %vm1054, %v1012, 0
      %v1156 = vsel %vm1054, %v1013, 0
      %1158 = vmatpush.msra.mxu0 0.0
      %1159 = vmatpush.msra.mxu0 0.0
      %1160 = vmatpush.msra.mxu0 0.0
      %1161 = vmatpush.msra.mxu0 0.0
      %1162 = vmatpush.msra.mxu0 0.0
      %1163 = vmatpush.msra.mxu0 0.0
      %1164 = vmatpush.msra.mxu0 0.0
      %1165 = vmatpush.msra.mxu0 0.0
      %1166 = vmatpush.msra.mxu0 0.0
      %1167 = vmatpush.msra.mxu0 0.0
      %1168 = vmatpush.msra.mxu0 0.0
      %1169 = vmatpush.msra.mxu0 0.0
      %1170 = vmatpush.msra.mxu0 0.0
      %1171 = vmatpush.msra.mxu0 0.0
      %1172 = vmatpush.msra.mxu0 %v1006
      %1173 = vmatpush.msra.mxu0 %v1002
      %1174 = vmatmul.f32.gmra.mxu0 %v1150
      %v1175 = vpop.f32.mrf.mxu0
      %v1176 = vadd.f32 %v1081, %v1175
      %1177 = vmatmul.f32.gmra.mxu0 %v1152
      %v1178 = vpop.f32.mrf.mxu0
      %v1179 = vadd.f32 %v1084, %v1178
      %1180 = vmatmul.f32.gmra.mxu0 %v1154
      %v1181 = vpop.f32.mrf.mxu0
      %v1182 = vadd.f32 %v1087, %v1181
      %1183 = vmatmul.f32.gmra.mxu0 %v1156
      %v1184 = vpop.f32.mrf.mxu0
      %v1185 = vadd.f32 %v1090, %v1184
      %1186 = vdwg.mxu0
      %1187 = vmatpush.msra.mxu0 0.0
      %1188 = vmatpush.msra.mxu0 0.0
      %1189 = vmatpush.msra.mxu0 0.0
      %1190 = vmatpush.msra.mxu0 0.0
      %1191 = vmatpush.msra.mxu0 0.0
      %1192 = vmatpush.msra.mxu0 0.0
      %1193 = vmatpush.msra.mxu0 0.0
      %1194 = vmatpush.msra.mxu0 0.0
      %1195 = vmatpush.msra.mxu0 0.0
      %1196 = vmatpush.msra.mxu0 0.0
      %1197 = vmatpush.msra.mxu0 0.0
      %1198 = vmatpush.msra.mxu0 0.0
      %1199 = vmatpush.msra.mxu0 0.0
      %1200 = vmatpush.msra.mxu0 0.0
      %1201 = vmatpush.msra.mxu0 %v1007
      %1202 = vmatpush.msra.mxu0 %v1003
      %1203 = vmatmul.f32.gmra.mxu0 %v1150
      %v1204 = vpop.f32.mrf.mxu0
      %v1205 = vadd.f32 %v1110, %v1204
      %1206 = vmatmul.f32.gmra.mxu0 %v1152
      %v1207 = vpop.f32.mrf.mxu0
      %v1208 = vadd.f32 %v1113, %v1207
      %1209 = vmatmul.f32.gmra.mxu0 %v1154
      %v1210 = vpop.f32.mrf.mxu0
      %v1211 = vadd.f32 %v1116, %v1210
      %1212 = vmatmul.f32.gmra.mxu0 %v1156
      %v1213 = vpop.f32.mrf.mxu0
      %v1214 = vadd.f32 %v1119, %v1213
      %1215 = vdwg.mxu0
      %1216 = vmatpush.msra.mxu0 0.0
      %1217 = vmatpush.msra.mxu0 0.0
      %1218 = vmatpush.msra.mxu0 0.0
      %1219 = vmatpush.msra.mxu0 0.0
      %1220 = vmatpush.msra.mxu0 0.0
      %1221 = vmatpush.msra.mxu0 0.0
      %1222 = vmatpush.msra.mxu0 0.0
      %1223 = vmatpush.msra.mxu0 0.0
      %1224 = vmatpush.msra.mxu0 0.0
      %1225 = vmatpush.msra.mxu0 0.0
      %1226 = vmatpush.msra.mxu0 0.0
      %1227 = vmatpush.msra.mxu0 0.0
      %1228 = vmatpush.msra.mxu0 0.0
      %1229 = vmatpush.msra.mxu0 0.0
      %1230 = vmatpush.msra.mxu0 %v1008
      %1231 = vmatpush.msra.mxu0 %v1004
      %1232 = vmatmul.f32.gmra.mxu0 %v1150
      %v1233 = vpop.f32.mrf.mxu0
      %v1234 = vadd.f32 %v1139, %v1233
      %1235 = vmatmul.f32.gmra.mxu0 %v1152
      %v1236 = vpop.f32.mrf.mxu0
      %v1237 = vadd.f32 %v1142, %v1236
      %1238 = vmatmul.f32.gmra.mxu0 %v1154
      %v1239 = vpop.f32.mrf.mxu0
      %v1240 = vadd.f32 %v1145, %v1239
      %1241 = vmatmul.f32.gmra.mxu0 %v1156
      %v1242 = vpop.f32.mrf.mxu0
      %v1243 = vadd.f32 %v1148, %v1242
      %1244 = vdwg.mxu0
      %1245 = vrot.lane.b32.xlu0 %v1010, 96
      %v1246 = vpop.permute.xlu0 %1245
      %1247 = vrot.lane.b32.xlu0 %v1011, 96
      %v1248 = vpop.permute.xlu0 %1247
      %1249 = vrot.lane.b32.xlu0 %v1012, 96
      %v1250 = vpop.permute.xlu0 %1249
      %1251 = vrot.lane.b32.xlu0 %v1013, 96
      %v1252 = vpop.permute.xlu0 %1251
      %1253 = vrot.lane.b32.xlu0 %v1002, 126
      %v1254 = vpop.permute.xlu0 %1253
      %1255 = vrot.lane.b32.xlu0 %v1003, 126
      %v1256 = vpop.permute.xlu0 %1255
      %1257 = vrot.lane.b32.xlu0 %v1004, 126
      %v1258 = vpop.permute.xlu0 %1257
      %1259 = vrot.lane.b32.xlu0 %v1006, 126
      %v1260 = vpop.permute.xlu0 %1259
      %1261 = vrot.lane.b32.xlu0 %v1007, 126
      %v1262 = vpop.permute.xlu0 %1261
      %1263 = vrot.lane.b32.xlu0 %v1008, 126
      %v1264 = vpop.permute.xlu0 %1263
      %v1265 = vsel %vm563, %v1254, %v1256
      %v1266 = vsel %vm563, %v1256, %v1258
      %v1267 = vsel %vm563, %v1260, %v1262
      %v1268 = vsel %vm563, %v1262, %v1264
      %v1275 = vsel %vm1054, %v1246, 0
      %v1277 = vsel %vm1054, %v1248, 0
      %v1279 = vsel %vm1054, %v1250, 0
      %v1281 = vsel %vm1054, %v1252, 0
      %1283 = vmatpush.msra.mxu0 0.0
      %1284 = vmatpush.msra.mxu0 0.0
      %1285 = vmatpush.msra.mxu0 0.0
      %1286 = vmatpush.msra.mxu0 0.0
      %1287 = vmatpush.msra.mxu0 0.0
      %1288 = vmatpush.msra.mxu0 0.0
      %1289 = vmatpush.msra.mxu0 0.0
      %1290 = vmatpush.msra.mxu0 0.0
      %1291 = vmatpush.msra.mxu0 0.0
      %1292 = vmatpush.msra.mxu0 0.0
      %1293 = vmatpush.msra.mxu0 0.0
      %1294 = vmatpush.msra.mxu0 0.0
      %1295 = vmatpush.msra.mxu0 0.0
      %1296 = vmatpush.msra.mxu0 0.0
      %1297 = vmatpush.msra.mxu0 %v1267
      %1298 = vmatpush.msra.mxu0 %v1265
      %1299 = vmatmul.f32.gmra.mxu0 %v1275
      %v1300 = vpop.f32.mrf.mxu0
      %v1301 = vadd.f32 0.0, %v1300
      %1302 = vmatmul.f32.gmra.mxu0 %v1277
      %v1303 = vpop.f32.mrf.mxu0
      %v1304 = vadd.f32 0.0, %v1303
      %1305 = vmatmul.f32.gmra.mxu0 %v1279
      %v1306 = vpop.f32.mrf.mxu0
      %v1307 = vadd.f32 0.0, %v1306
      %1308 = vmatmul.f32.gmra.mxu0 %v1281
      %v1309 = vpop.f32.mrf.mxu0
      %v1310 = vadd.f32 0.0, %v1309
      %1311 = vdwg.mxu0
      %1312 = vmatpush.msra.mxu0 0.0
      %1313 = vmatpush.msra.mxu0 0.0
      %1314 = vmatpush.msra.mxu0 0.0
      %1315 = vmatpush.msra.mxu0 0.0
      %1316 = vmatpush.msra.mxu0 0.0
      %1317 = vmatpush.msra.mxu0 0.0
      %1318 = vmatpush.msra.mxu0 0.0
      %1319 = vmatpush.msra.mxu0 0.0
      %1320 = vmatpush.msra.mxu0 0.0
      %1321 = vmatpush.msra.mxu0 0.0
      %1322 = vmatpush.msra.mxu0 0.0
      %1323 = vmatpush.msra.mxu0 0.0
      %1324 = vmatpush.msra.mxu0 0.0
      %1325 = vmatpush.msra.mxu0 0.0
      %1326 = vmatpush.msra.mxu0 %v1268
      %1327 = vmatpush.msra.mxu0 %v1266
      %1328 = vmatmul.f32.gmra.mxu0 %v1275
      %v1329 = vpop.f32.mrf.mxu0
      %v1330 = vadd.f32 0.0, %v1329
      %1331 = vmatmul.f32.gmra.mxu0 %v1277
      %v1332 = vpop.f32.mrf.mxu0
      %v1333 = vadd.f32 0.0, %v1332
      %1334 = vmatmul.f32.gmra.mxu0 %v1279
      %v1335 = vpop.f32.mrf.mxu0
      %v1336 = vadd.f32 0.0, %v1335
      %1337 = vmatmul.f32.gmra.mxu0 %v1281
      %v1338 = vpop.f32.mrf.mxu0
      %v1339 = vadd.f32 0.0, %v1338
      %1340 = vdwg.mxu0
      %1341 = vmatpush.msra.mxu0 0.0
      %1342 = vmatpush.msra.mxu0 0.0
      %1343 = vmatpush.msra.mxu0 0.0
      %1344 = vmatpush.msra.mxu0 0.0
      %1345 = vmatpush.msra.mxu0 0.0
      %1346 = vmatpush.msra.mxu0 0.0
      %1347 = vmatpush.msra.mxu0 0.0
      %1348 = vmatpush.msra.mxu0 0.0
      %1349 = vmatpush.msra.mxu0 0.0
      %1350 = vmatpush.msra.mxu0 0.0
      %1351 = vmatpush.msra.mxu0 0.0
      %1352 = vmatpush.msra.mxu0 0.0
      %1353 = vmatpush.msra.mxu0 0.0
      %1354 = vmatpush.msra.mxu0 0.0
      %1355 = vmatpush.msra.mxu0 %v1264
      %1356 = vmatpush.msra.mxu0 %v1258
      %1357 = vmatmul.f32.gmra.mxu0 %v1275
      %v1358 = vpop.f32.mrf.mxu0
      %v1359 = vadd.f32 0.0, %v1358
      %1360 = vmatmul.f32.gmra.mxu0 %v1277
      %v1361 = vpop.f32.mrf.mxu0
      %v1362 = vadd.f32 0.0, %v1361
      %1363 = vmatmul.f32.gmra.mxu0 %v1279
      %v1364 = vpop.f32.mrf.mxu0
      %v1365 = vadd.f32 0.0, %v1364
      %1366 = vmatmul.f32.gmra.mxu0 %v1281
      %v1367 = vpop.f32.mrf.mxu0
      %v1368 = vadd.f32 0.0, %v1367
      %1369 = vdwg.mxu0
      %v1370 = vadd.f32 %v1176, %v1301
      %v1371 = vadd.f32 %v1205, %v1330
      %v1372 = vadd.f32 %v1234, %v1359
      %v1373 = vadd.f32 %v1179, %v1304
      %v1374 = vadd.f32 %v1208, %v1333
      %v1375 = vadd.f32 %v1237, %v1362
      %v1376 = vadd.f32 %v1182, %v1307
      %v1377 = vadd.f32 %v1211, %v1336
      %v1378 = vadd.f32 %v1240, %v1365
      %v1379 = vadd.f32 %v1185, %v1310
      %v1380 = vadd.f32 %v1214, %v1339
      %v1381 = vadd.f32 %v1243, %v1368
      %1382 = vrot.lane.b32.xlu0 %v1010, 80
      %v1383 = vpop.permute.xlu0 %1382
      %1384 = vrot.lane.b32.xlu0 %v1011, 80
      %v1385 = vpop.permute.xlu0 %1384
      %1386 = vrot.lane.b32.xlu0 %v1012, 80
      %v1387 = vpop.permute.xlu0 %1386
      %1388 = vrot.lane.b32.xlu0 %v1013, 80
      %v1389 = vpop.permute.xlu0 %1388
      %1392 = vrot.lane.b32.xlu0 %v1002, 106
      %v1393 = vpop.permute.xlu0 %1392
      %1394 = vrot.lane.b32.xlu0 %v1003, 106
      %v1395 = vpop.permute.xlu0 %1394
      %1396 = vrot.lane.b32.xlu0 %v1004, 106
      %v1397 = vpop.permute.xlu0 %1396
      %1398 = vrot.lane.b32.xlu0 %v1005, 106
      %v1399 = vpop.permute.xlu0 %1398
      %1400 = vrot.lane.b32.xlu0 %v1006, 106
      %v1401 = vpop.permute.xlu0 %1400
      %1402 = vrot.lane.b32.xlu0 %v1007, 106
      %v1403 = vpop.permute.xlu0 %1402
      %1404 = vrot.lane.b32.xlu0 %v1008, 106
      %v1405 = vpop.permute.xlu0 %1404
      %1406 = vrot.lane.b32.xlu0 %v1009, 106
      %v1407 = vpop.permute.xlu0 %1406
      %v1408 = vsel %vm626, %v1393, %v1395
      %v1409 = vsel %vm626, %v1395, %v1397
      %v1410 = vsel %vm626, %v1397, %v1399
      %v1411 = vsel %vm626, %v1401, %v1403
      %v1412 = vsel %vm626, %v1403, %v1405
      %v1413 = vsel %vm626, %v1405, %v1407
      %v1420 = vsel %vm1054, %v1383, 0
      %v1422 = vsel %vm1054, %v1385, 0
      %v1424 = vsel %vm1054, %v1387, 0
      %v1426 = vsel %vm1054, %v1389, 0
      %1428 = vmatpush.msra.mxu0 0.0
      %1429 = vmatpush.msra.mxu0 0.0
      %1430 = vmatpush.msra.mxu0 0.0
      %1431 = vmatpush.msra.mxu0 0.0
      %1432 = vmatpush.msra.mxu0 0.0
      %1433 = vmatpush.msra.mxu0 0.0
      %1434 = vmatpush.msra.mxu0 0.0
      %1435 = vmatpush.msra.mxu0 0.0
      %1436 = vmatpush.msra.mxu0 0.0
      %1437 = vmatpush.msra.mxu0 0.0
      %1438 = vmatpush.msra.mxu0 0.0
      %1439 = vmatpush.msra.mxu0 0.0
      %1440 = vmatpush.msra.mxu0 0.0
      %1441 = vmatpush.msra.mxu0 0.0
      %1442 = vmatpush.msra.mxu0 %v1411
      %1443 = vmatpush.msra.mxu0 %v1408
      %1444 = vmatmul.f32.gmra.mxu0 %v1420
      %v1445 = vpop.f32.mrf.mxu0
      %v1446 = vadd.f32 0.0, %v1445
      %1447 = vmatmul.f32.gmra.mxu0 %v1422
      %v1448 = vpop.f32.mrf.mxu0
      %v1449 = vadd.f32 0.0, %v1448
      %1450 = vmatmul.f32.gmra.mxu0 %v1424
      %v1451 = vpop.f32.mrf.mxu0
      %v1452 = vadd.f32 0.0, %v1451
      %1453 = vmatmul.f32.gmra.mxu0 %v1426
      %v1454 = vpop.f32.mrf.mxu0
      %v1455 = vadd.f32 0.0, %v1454
      %1456 = vdwg.mxu0
      %1457 = vmatpush.msra.mxu0 0.0
      %1458 = vmatpush.msra.mxu0 0.0
      %1459 = vmatpush.msra.mxu0 0.0
      %1460 = vmatpush.msra.mxu0 0.0
      %1461 = vmatpush.msra.mxu0 0.0
      %1462 = vmatpush.msra.mxu0 0.0
      %1463 = vmatpush.msra.mxu0 0.0
      %1464 = vmatpush.msra.mxu0 0.0
      %1465 = vmatpush.msra.mxu0 0.0
      %1466 = vmatpush.msra.mxu0 0.0
      %1467 = vmatpush.msra.mxu0 0.0
      %1468 = vmatpush.msra.mxu0 0.0
      %1469 = vmatpush.msra.mxu0 0.0
      %1470 = vmatpush.msra.mxu0 0.0
      %1471 = vmatpush.msra.mxu0 %v1412
      %1472 = vmatpush.msra.mxu0 %v1409
      %1473 = vmatmul.f32.gmra.mxu0 %v1420
      %v1474 = vpop.f32.mrf.mxu0
      %v1475 = vadd.f32 0.0, %v1474
      %1476 = vmatmul.f32.gmra.mxu0 %v1422
      %v1477 = vpop.f32.mrf.mxu0
      %v1478 = vadd.f32 0.0, %v1477
      %1479 = vmatmul.f32.gmra.mxu0 %v1424
      %v1480 = vpop.f32.mrf.mxu0
      %v1481 = vadd.f32 0.0, %v1480
      %1482 = vmatmul.f32.gmra.mxu0 %v1426
      %v1483 = vpop.f32.mrf.mxu0
      %v1484 = vadd.f32 0.0, %v1483
      %1485 = vdwg.mxu0
      %1486 = vmatpush.msra.mxu0 0.0
      %1487 = vmatpush.msra.mxu0 0.0
      %1488 = vmatpush.msra.mxu0 0.0
      %1489 = vmatpush.msra.mxu0 0.0
      %1490 = vmatpush.msra.mxu0 0.0
      %1491 = vmatpush.msra.mxu0 0.0
      %1492 = vmatpush.msra.mxu0 0.0
      %1493 = vmatpush.msra.mxu0 0.0
      %1494 = vmatpush.msra.mxu0 0.0
      %1495 = vmatpush.msra.mxu0 0.0
      %1496 = vmatpush.msra.mxu0 0.0
      %1497 = vmatpush.msra.mxu0 0.0
      %1498 = vmatpush.msra.mxu0 0.0
      %1499 = vmatpush.msra.mxu0 0.0
      %1500 = vmatpush.msra.mxu0 %v1413
      %1501 = vmatpush.msra.mxu0 %v1410
      %1502 = vmatmul.f32.gmra.mxu0 %v1420
      %v1503 = vpop.f32.mrf.mxu0
      %v1504 = vadd.f32 0.0, %v1503
      %1505 = vmatmul.f32.gmra.mxu0 %v1422
      %v1506 = vpop.f32.mrf.mxu0
      %v1507 = vadd.f32 0.0, %v1506
      %1508 = vmatmul.f32.gmra.mxu0 %v1424
      %v1509 = vpop.f32.mrf.mxu0
      %v1510 = vadd.f32 0.0, %v1509
      %1511 = vmatmul.f32.gmra.mxu0 %v1426
      %v1512 = vpop.f32.mrf.mxu0
      %v1513 = vadd.f32 0.0, %v1512
      %1514 = vdwg.mxu0
      %v1515 = vadd.f32 %v1370, %v1446
      %v1516 = vadd.f32 %v1371, %v1475
      %v1517 = vadd.f32 %v1372, %v1504
      %v1518 = vadd.f32 %v1373, %v1449
      %v1519 = vadd.f32 %v1374, %v1478
      %v1520 = vadd.f32 %v1375, %v1507
      %v1521 = vadd.f32 %v1376, %v1452
      %v1522 = vadd.f32 %v1377, %v1481
      %v1523 = vadd.f32 %v1378, %v1510
      %v1524 = vadd.f32 %v1379, %v1455
      %v1525 = vadd.f32 %v1380, %v1484
      %v1526 = vadd.f32 %v1381, %v1513
      %1527 = vrot.lane.b32.xlu0 %v1010, 64
      %v1528 = vpop.permute.xlu0 %1527
      %1529 = vrot.lane.b32.xlu0 %v1011, 64
      %v1530 = vpop.permute.xlu0 %1529
      %1531 = vrot.lane.b32.xlu0 %v1012, 64
      %v1532 = vpop.permute.xlu0 %1531
      %1533 = vrot.lane.b32.xlu0 %v1013, 64
      %v1534 = vpop.permute.xlu0 %1533
      %1535 = vrot.lane.b32.xlu0 %v1002, 105
      %v1536 = vpop.permute.xlu0 %1535
      %1537 = vrot.lane.b32.xlu0 %v1003, 105
      %v1538 = vpop.permute.xlu0 %1537
      %1539 = vrot.lane.b32.xlu0 %v1004, 105
      %v1540 = vpop.permute.xlu0 %1539
      %1541 = vrot.lane.b32.xlu0 %v1005, 105
      %v1542 = vpop.permute.xlu0 %1541
      %1543 = vrot.lane.b32.xlu0 %v1006, 105
      %v1544 = vpop.permute.xlu0 %1543
      %1545 = vrot.lane.b32.xlu0 %v1007, 105
      %v1546 = vpop.permute.xlu0 %1545
      %1547 = vrot.lane.b32.xlu0 %v1008, 105
      %v1548 = vpop.permute.xlu0 %1547
      %1549 = vrot.lane.b32.xlu0 %v1009, 105
      %v1550 = vpop.permute.xlu0 %1549
      %v1551 = vsel %vm689, %v1536, %v1538
      %v1552 = vsel %vm689, %v1538, %v1540
      %v1553 = vsel %vm689, %v1540, %v1542
      %v1554 = vsel %vm689, %v1544, %v1546
      %v1555 = vsel %vm689, %v1546, %v1548
      %v1556 = vsel %vm689, %v1548, %v1550
      %v1563 = vsel %vm1054, %v1528, 0
      %v1565 = vsel %vm1054, %v1530, 0
      %v1567 = vsel %vm1054, %v1532, 0
      %v1569 = vsel %vm1054, %v1534, 0
      %1571 = vmatpush.msra.mxu0 0.0
      %1572 = vmatpush.msra.mxu0 0.0
      %1573 = vmatpush.msra.mxu0 0.0
      %1574 = vmatpush.msra.mxu0 0.0
      %1575 = vmatpush.msra.mxu0 0.0
      %1576 = vmatpush.msra.mxu0 0.0
      %1577 = vmatpush.msra.mxu0 0.0
      %1578 = vmatpush.msra.mxu0 0.0
      %1579 = vmatpush.msra.mxu0 0.0
      %1580 = vmatpush.msra.mxu0 0.0
      %1581 = vmatpush.msra.mxu0 0.0
      %1582 = vmatpush.msra.mxu0 0.0
      %1583 = vmatpush.msra.mxu0 0.0
      %1584 = vmatpush.msra.mxu0 0.0
      %1585 = vmatpush.msra.mxu0 %v1554
      %1586 = vmatpush.msra.mxu0 %v1551
      %1587 = vmatmul.f32.gmra.mxu0 %v1563
      %v1588 = vpop.f32.mrf.mxu0
      %v1589 = vadd.f32 0.0, %v1588
      %1590 = vmatmul.f32.gmra.mxu0 %v1565
      %v1591 = vpop.f32.mrf.mxu0
      %v1592 = vadd.f32 0.0, %v1591
      %1593 = vmatmul.f32.gmra.mxu0 %v1567
      %v1594 = vpop.f32.mrf.mxu0
      %v1595 = vadd.f32 0.0, %v1594
      %1596 = vmatmul.f32.gmra.mxu0 %v1569
      %v1597 = vpop.f32.mrf.mxu0
      %v1598 = vadd.f32 0.0, %v1597
      %1599 = vdwg.mxu0
      %1600 = vmatpush.msra.mxu0 0.0
      %1601 = vmatpush.msra.mxu0 0.0
      %1602 = vmatpush.msra.mxu0 0.0
      %1603 = vmatpush.msra.mxu0 0.0
      %1604 = vmatpush.msra.mxu0 0.0
      %1605 = vmatpush.msra.mxu0 0.0
      %1606 = vmatpush.msra.mxu0 0.0
      %1607 = vmatpush.msra.mxu0 0.0
      %1608 = vmatpush.msra.mxu0 0.0
      %1609 = vmatpush.msra.mxu0 0.0
      %1610 = vmatpush.msra.mxu0 0.0
      %1611 = vmatpush.msra.mxu0 0.0
      %1612 = vmatpush.msra.mxu0 0.0
      %1613 = vmatpush.msra.mxu0 0.0
      %1614 = vmatpush.msra.mxu0 %v1555
      %1615 = vmatpush.msra.mxu0 %v1552
      %1616 = vmatmul.f32.gmra.mxu0 %v1563
      %v1617 = vpop.f32.mrf.mxu0
      %v1618 = vadd.f32 0.0, %v1617
      %1619 = vmatmul.f32.gmra.mxu0 %v1565
      %v1620 = vpop.f32.mrf.mxu0
      %v1621 = vadd.f32 0.0, %v1620
      %1622 = vmatmul.f32.gmra.mxu0 %v1567
      %v1623 = vpop.f32.mrf.mxu0
      %v1624 = vadd.f32 0.0, %v1623
      %1625 = vmatmul.f32.gmra.mxu0 %v1569
      %v1626 = vpop.f32.mrf.mxu0
      %v1627 = vadd.f32 0.0, %v1626
      %1628 = vdwg.mxu0
      %1629 = vmatpush.msra.mxu0 0.0
      %1630 = vmatpush.msra.mxu0 0.0
      %1631 = vmatpush.msra.mxu0 0.0
      %1632 = vmatpush.msra.mxu0 0.0
      %1633 = vmatpush.msra.mxu0 0.0
      %1634 = vmatpush.msra.mxu0 0.0
      %1635 = vmatpush.msra.mxu0 0.0
      %1636 = vmatpush.msra.mxu0 0.0
      %1637 = vmatpush.msra.mxu0 0.0
      %1638 = vmatpush.msra.mxu0 0.0
      %1639 = vmatpush.msra.mxu0 0.0
      %1640 = vmatpush.msra.mxu0 0.0
      %1641 = vmatpush.msra.mxu0 0.0
      %1642 = vmatpush.msra.mxu0 0.0
      %1643 = vmatpush.msra.mxu0 %v1556
      %1644 = vmatpush.msra.mxu0 %v1553
      %1645 = vmatmul.f32.gmra.mxu0 %v1563
      %v1646 = vpop.f32.mrf.mxu0
      %v1647 = vadd.f32 0.0, %v1646
      %1648 = vmatmul.f32.gmra.mxu0 %v1565
      %v1649 = vpop.f32.mrf.mxu0
      %v1650 = vadd.f32 0.0, %v1649
      %1651 = vmatmul.f32.gmra.mxu0 %v1567
      %v1652 = vpop.f32.mrf.mxu0
      %v1653 = vadd.f32 0.0, %v1652
      %1654 = vmatmul.f32.gmra.mxu0 %v1569
      %v1655 = vpop.f32.mrf.mxu0
      %v1656 = vadd.f32 0.0, %v1655
      %1657 = vdwg.mxu0
      %v1658 = vadd.f32 %v1515, %v1589
      %v1659 = vadd.f32 %v1516, %v1618
      %v1660 = vadd.f32 %v1517, %v1647
      %v1661 = vadd.f32 %v1518, %v1592
      %v1662 = vadd.f32 %v1519, %v1621
      %v1663 = vadd.f32 %v1520, %v1650
      %v1664 = vadd.f32 %v1521, %v1595
      %v1665 = vadd.f32 %v1522, %v1624
      %v1666 = vadd.f32 %v1523, %v1653
      %v1667 = vadd.f32 %v1524, %v1598
      %v1668 = vadd.f32 %v1525, %v1627
      %v1669 = vadd.f32 %v1526, %v1656
      %1670 = vrot.lane.b32.xlu0 %v1010, 48
      %v1671 = vpop.permute.xlu0 %1670
      %1672 = vrot.lane.b32.xlu0 %v1011, 48
      %v1673 = vpop.permute.xlu0 %1672
      %1674 = vrot.lane.b32.xlu0 %v1012, 48
      %v1675 = vpop.permute.xlu0 %1674
      %1676 = vrot.lane.b32.xlu0 %v1013, 48
      %v1677 = vpop.permute.xlu0 %1676
      %1678 = vrot.lane.b32.xlu0 %v1002, 104
      %v1679 = vpop.permute.xlu0 %1678
      %1680 = vrot.lane.b32.xlu0 %v1003, 104
      %v1681 = vpop.permute.xlu0 %1680
      %1682 = vrot.lane.b32.xlu0 %v1004, 104
      %v1683 = vpop.permute.xlu0 %1682
      %1684 = vrot.lane.b32.xlu0 %v1005, 104
      %v1685 = vpop.permute.xlu0 %1684
      %1686 = vrot.lane.b32.xlu0 %v1006, 104
      %v1687 = vpop.permute.xlu0 %1686
      %1688 = vrot.lane.b32.xlu0 %v1007, 104
      %v1689 = vpop.permute.xlu0 %1688
      %1690 = vrot.lane.b32.xlu0 %v1008, 104
      %v1691 = vpop.permute.xlu0 %1690
      %1692 = vrot.lane.b32.xlu0 %v1009, 104
      %v1693 = vpop.permute.xlu0 %1692
      %v1694 = vsel %vm752, %v1679, %v1681
      %v1695 = vsel %vm752, %v1681, %v1683
      %v1696 = vsel %vm752, %v1683, %v1685
      %v1697 = vsel %vm752, %v1687, %v1689
      %v1698 = vsel %vm752, %v1689, %v1691
      %v1699 = vsel %vm752, %v1691, %v1693
      %v1706 = vsel %vm1054, %v1671, 0
      %v1708 = vsel %vm1054, %v1673, 0
      %v1710 = vsel %vm1054, %v1675, 0
      %v1712 = vsel %vm1054, %v1677, 0
      %1714 = vmatpush.msra.mxu0 0.0
      %1715 = vmatpush.msra.mxu0 0.0
      %1716 = vmatpush.msra.mxu0 0.0
      %1717 = vmatpush.msra.mxu0 0.0
      %1718 = vmatpush.msra.mxu0 0.0
      %1719 = vmatpush.msra.mxu0 0.0
      %1720 = vmatpush.msra.mxu0 0.0
      %1721 = vmatpush.msra.mxu0 0.0
      %1722 = vmatpush.msra.mxu0 0.0
      %1723 = vmatpush.msra.mxu0 0.0
      %1724 = vmatpush.msra.mxu0 0.0
      %1725 = vmatpush.msra.mxu0 0.0
      %1726 = vmatpush.msra.mxu0 0.0
      %1727 = vmatpush.msra.mxu0 0.0
      %1728 = vmatpush.msra.mxu0 %v1697
      %1729 = vmatpush.msra.mxu0 %v1694
      %1730 = vmatmul.f32.gmra.mxu0 %v1706
      %v1731 = vpop.f32.mrf.mxu0
      %v1732 = vadd.f32 0.0, %v1731
      %1733 = vmatmul.f32.gmra.mxu0 %v1708
      %v1734 = vpop.f32.mrf.mxu0
      %v1735 = vadd.f32 0.0, %v1734
      %1736 = vmatmul.f32.gmra.mxu0 %v1710
      %v1737 = vpop.f32.mrf.mxu0
      %v1738 = vadd.f32 0.0, %v1737
      %1739 = vmatmul.f32.gmra.mxu0 %v1712
      %v1740 = vpop.f32.mrf.mxu0
      %v1741 = vadd.f32 0.0, %v1740
      %1742 = vdwg.mxu0
      %1743 = vmatpush.msra.mxu0 0.0
      %1744 = vmatpush.msra.mxu0 0.0
      %1745 = vmatpush.msra.mxu0 0.0
      %1746 = vmatpush.msra.mxu0 0.0
      %1747 = vmatpush.msra.mxu0 0.0
      %1748 = vmatpush.msra.mxu0 0.0
      %1749 = vmatpush.msra.mxu0 0.0
      %1750 = vmatpush.msra.mxu0 0.0
      %1751 = vmatpush.msra.mxu0 0.0
      %1752 = vmatpush.msra.mxu0 0.0
      %1753 = vmatpush.msra.mxu0 0.0
      %1754 = vmatpush.msra.mxu0 0.0
      %1755 = vmatpush.msra.mxu0 0.0
      %1756 = vmatpush.msra.mxu0 0.0
      %1757 = vmatpush.msra.mxu0 %v1698
      %1758 = vmatpush.msra.mxu0 %v1695
      %1759 = vmatmul.f32.gmra.mxu0 %v1706
      %v1760 = vpop.f32.mrf.mxu0
      %v1761 = vadd.f32 0.0, %v1760
      %1762 = vmatmul.f32.gmra.mxu0 %v1708
      %v1763 = vpop.f32.mrf.mxu0
      %v1764 = vadd.f32 0.0, %v1763
      %1765 = vmatmul.f32.gmra.mxu0 %v1710
      %v1766 = vpop.f32.mrf.mxu0
      %v1767 = vadd.f32 0.0, %v1766
      %1768 = vmatmul.f32.gmra.mxu0 %v1712
      %v1769 = vpop.f32.mrf.mxu0
      %v1770 = vadd.f32 0.0, %v1769
      %1771 = vdwg.mxu0
      %1772 = vmatpush.msra.mxu0 0.0
      %1773 = vmatpush.msra.mxu0 0.0
      %1774 = vmatpush.msra.mxu0 0.0
      %1775 = vmatpush.msra.mxu0 0.0
      %1776 = vmatpush.msra.mxu0 0.0
      %1777 = vmatpush.msra.mxu0 0.0
      %1778 = vmatpush.msra.mxu0 0.0
      %1779 = vmatpush.msra.mxu0 0.0
      %1780 = vmatpush.msra.mxu0 0.0
      %1781 = vmatpush.msra.mxu0 0.0
      %1782 = vmatpush.msra.mxu0 0.0
      %1783 = vmatpush.msra.mxu0 0.0
      %1784 = vmatpush.msra.mxu0 0.0
      %1785 = vmatpush.msra.mxu0 0.0
      %1786 = vmatpush.msra.mxu0 %v1699
      %1787 = vmatpush.msra.mxu0 %v1696
      %1788 = vmatmul.f32.gmra.mxu0 %v1706
      %v1789 = vpop.f32.mrf.mxu0
      %v1790 = vadd.f32 0.0, %v1789
      %1791 = vmatmul.f32.gmra.mxu0 %v1708
      %v1792 = vpop.f32.mrf.mxu0
      %v1793 = vadd.f32 0.0, %v1792
      %1794 = vmatmul.f32.gmra.mxu0 %v1710
      %v1795 = vpop.f32.mrf.mxu0
      %v1796 = vadd.f32 0.0, %v1795
      %1797 = vmatmul.f32.gmra.mxu0 %v1712
      %v1798 = vpop.f32.mrf.mxu0
      %v1799 = vadd.f32 0.0, %v1798
      %1800 = vdwg.mxu0
      %v1801 = vadd.f32 %v1658, %v1732
      %v1802 = vadd.f32 %v1659, %v1761
      %v1803 = vadd.f32 %v1660, %v1790
      %v1804 = vadd.f32 %v1661, %v1735
      %v1805 = vadd.f32 %v1662, %v1764
      %v1806 = vadd.f32 %v1663, %v1793
      %v1807 = vadd.f32 %v1664, %v1738
      %v1808 = vadd.f32 %v1665, %v1767
      %v1809 = vadd.f32 %v1666, %v1796
      %v1810 = vadd.f32 %v1667, %v1741
      %v1811 = vadd.f32 %v1668, %v1770
      %v1812 = vadd.f32 %v1669, %v1799
      %1813 = vrot.lane.b32.xlu0 %v1010, 32
      %v1814 = vpop.permute.xlu0 %1813
      %1815 = vrot.lane.b32.xlu0 %v1011, 32
      %v1816 = vpop.permute.xlu0 %1815
      %1817 = vrot.lane.b32.xlu0 %v1012, 32
      %v1818 = vpop.permute.xlu0 %1817
      %1819 = vrot.lane.b32.xlu0 %v1013, 32
      %v1820 = vpop.permute.xlu0 %1819
      %1821 = vrot.lane.b32.xlu0 %v1002, 84
      %v1822 = vpop.permute.xlu0 %1821
      %1823 = vrot.lane.b32.xlu0 %v1003, 84
      %v1824 = vpop.permute.xlu0 %1823
      %1825 = vrot.lane.b32.xlu0 %v1004, 84
      %v1826 = vpop.permute.xlu0 %1825
      %1827 = vrot.lane.b32.xlu0 %v1005, 84
      %v1828 = vpop.permute.xlu0 %1827
      %1829 = vrot.lane.b32.xlu0 %v1006, 84
      %v1830 = vpop.permute.xlu0 %1829
      %1831 = vrot.lane.b32.xlu0 %v1007, 84
      %v1832 = vpop.permute.xlu0 %1831
      %1833 = vrot.lane.b32.xlu0 %v1008, 84
      %v1834 = vpop.permute.xlu0 %1833
      %1835 = vrot.lane.b32.xlu0 %v1009, 84
      %v1836 = vpop.permute.xlu0 %1835
      %v1837 = vsel %vm815, %v1822, %v1824
      %v1838 = vsel %vm815, %v1824, %v1826
      %v1839 = vsel %vm815, %v1826, %v1828
      %v1840 = vsel %vm815, %v1830, %v1832
      %v1841 = vsel %vm815, %v1832, %v1834
      %v1842 = vsel %vm815, %v1834, %v1836
      %v1849 = vsel %vm1054, %v1814, 0
      %v1851 = vsel %vm1054, %v1816, 0
      %v1853 = vsel %vm1054, %v1818, 0
      %v1855 = vsel %vm1054, %v1820, 0
      %1857 = vmatpush.msra.mxu0 0.0
      %1858 = vmatpush.msra.mxu0 0.0
      %1859 = vmatpush.msra.mxu0 0.0
      %1860 = vmatpush.msra.mxu0 0.0
      %1861 = vmatpush.msra.mxu0 0.0
      %1862 = vmatpush.msra.mxu0 0.0
      %1863 = vmatpush.msra.mxu0 0.0
      %1864 = vmatpush.msra.mxu0 0.0
      %1865 = vmatpush.msra.mxu0 0.0
      %1866 = vmatpush.msra.mxu0 0.0
      %1867 = vmatpush.msra.mxu0 0.0
      %1868 = vmatpush.msra.mxu0 0.0
      %1869 = vmatpush.msra.mxu0 0.0
      %1870 = vmatpush.msra.mxu0 0.0
      %1871 = vmatpush.msra.mxu0 %v1840
      %1872 = vmatpush.msra.mxu0 %v1837
      %1873 = vmatmul.f32.gmra.mxu0 %v1849
      %v1874 = vpop.f32.mrf.mxu0
      %v1875 = vadd.f32 0.0, %v1874
      %1876 = vmatmul.f32.gmra.mxu0 %v1851
      %v1877 = vpop.f32.mrf.mxu0
      %v1878 = vadd.f32 0.0, %v1877
      %1879 = vmatmul.f32.gmra.mxu0 %v1853
      %v1880 = vpop.f32.mrf.mxu0
      %v1881 = vadd.f32 0.0, %v1880
      %1882 = vmatmul.f32.gmra.mxu0 %v1855
      %v1883 = vpop.f32.mrf.mxu0
      %v1884 = vadd.f32 0.0, %v1883
      %1885 = vdwg.mxu0
      %1886 = vmatpush.msra.mxu0 0.0
      %1887 = vmatpush.msra.mxu0 0.0
      %1888 = vmatpush.msra.mxu0 0.0
      %1889 = vmatpush.msra.mxu0 0.0
      %1890 = vmatpush.msra.mxu0 0.0
      %1891 = vmatpush.msra.mxu0 0.0
      %1892 = vmatpush.msra.mxu0 0.0
      %1893 = vmatpush.msra.mxu0 0.0
      %1894 = vmatpush.msra.mxu0 0.0
      %1895 = vmatpush.msra.mxu0 0.0
      %1896 = vmatpush.msra.mxu0 0.0
      %1897 = vmatpush.msra.mxu0 0.0
      %1898 = vmatpush.msra.mxu0 0.0
      %1899 = vmatpush.msra.mxu0 0.0
      %1900 = vmatpush.msra.mxu0 %v1841
      %1901 = vmatpush.msra.mxu0 %v1838
      %1902 = vmatmul.f32.gmra.mxu0 %v1849
      %v1903 = vpop.f32.mrf.mxu0
      %v1904 = vadd.f32 0.0, %v1903
      %1905 = vmatmul.f32.gmra.mxu0 %v1851
      %v1906 = vpop.f32.mrf.mxu0
      %v1907 = vadd.f32 0.0, %v1906
      %1908 = vmatmul.f32.gmra.mxu0 %v1853
      %v1909 = vpop.f32.mrf.mxu0
      %v1910 = vadd.f32 0.0, %v1909
      %1911 = vmatmul.f32.gmra.mxu0 %v1855
      %v1912 = vpop.f32.mrf.mxu0
      %v1913 = vadd.f32 0.0, %v1912
      %1914 = vdwg.mxu0
      %1915 = vmatpush.msra.mxu0 0.0
      %1916 = vmatpush.msra.mxu0 0.0
      %1917 = vmatpush.msra.mxu0 0.0
      %1918 = vmatpush.msra.mxu0 0.0
      %1919 = vmatpush.msra.mxu0 0.0
      %1920 = vmatpush.msra.mxu0 0.0
      %1921 = vmatpush.msra.mxu0 0.0
      %1922 = vmatpush.msra.mxu0 0.0
      %1923 = vmatpush.msra.mxu0 0.0
      %1924 = vmatpush.msra.mxu0 0.0
      %1925 = vmatpush.msra.mxu0 0.0
      %1926 = vmatpush.msra.mxu0 0.0
      %1927 = vmatpush.msra.mxu0 0.0
      %1928 = vmatpush.msra.mxu0 0.0
      %1929 = vmatpush.msra.mxu0 %v1842
      %1930 = vmatpush.msra.mxu0 %v1839
      %1931 = vmatmul.f32.gmra.mxu0 %v1849
      %v1932 = vpop.f32.mrf.mxu0
      %v1933 = vadd.f32 0.0, %v1932
      %1934 = vmatmul.f32.gmra.mxu0 %v1851
      %v1935 = vpop.f32.mrf.mxu0
      %v1936 = vadd.f32 0.0, %v1935
      %1937 = vmatmul.f32.gmra.mxu0 %v1853
      %v1938 = vpop.f32.mrf.mxu0
      %v1939 = vadd.f32 0.0, %v1938
      %1940 = vmatmul.f32.gmra.mxu0 %v1855
      %v1941 = vpop.f32.mrf.mxu0
      %v1942 = vadd.f32 0.0, %v1941
      %1943 = vdwg.mxu0
      %v1944 = vadd.f32 %v1801, %v1875
      %v1945 = vadd.f32 %v1802, %v1904
      %v1946 = vadd.f32 %v1803, %v1933
      %v1947 = vadd.f32 %v1804, %v1878
      %v1948 = vadd.f32 %v1805, %v1907
      %v1949 = vadd.f32 %v1806, %v1936
      %v1950 = vadd.f32 %v1807, %v1881
      %v1951 = vadd.f32 %v1808, %v1910
      %v1952 = vadd.f32 %v1809, %v1939
      %v1953 = vadd.f32 %v1810, %v1884
      %v1954 = vadd.f32 %v1811, %v1913
      %v1955 = vadd.f32 %v1812, %v1942
      %1956 = vrot.lane.b32.xlu0 %v1010, 16
      %v1957 = vpop.permute.xlu0 %1956
      %1958 = vrot.lane.b32.xlu0 %v1011, 16
      %v1959 = vpop.permute.xlu0 %1958
      %1960 = vrot.lane.b32.xlu0 %v1012, 16
      %v1961 = vpop.permute.xlu0 %1960
      %1962 = vrot.lane.b32.xlu0 %v1013, 16
      %v1963 = vpop.permute.xlu0 %1962
      %1964 = vrot.lane.b32.xlu0 %v1002, 83
      %v1965 = vpop.permute.xlu0 %1964
      %1966 = vrot.lane.b32.xlu0 %v1003, 83
      %v1967 = vpop.permute.xlu0 %1966
      %1968 = vrot.lane.b32.xlu0 %v1004, 83
      %v1969 = vpop.permute.xlu0 %1968
      %1970 = vrot.lane.b32.xlu0 %v1005, 83
      %v1971 = vpop.permute.xlu0 %1970
      %1972 = vrot.lane.b32.xlu0 %v1006, 83
      %v1973 = vpop.permute.xlu0 %1972
      %1974 = vrot.lane.b32.xlu0 %v1007, 83
      %v1975 = vpop.permute.xlu0 %1974
      %1976 = vrot.lane.b32.xlu0 %v1008, 83
      %v1977 = vpop.permute.xlu0 %1976
      %1978 = vrot.lane.b32.xlu0 %v1009, 83
      %v1979 = vpop.permute.xlu0 %1978
      %v1980 = vsel %vm878, %v1965, %v1967
      %v1981 = vsel %vm878, %v1967, %v1969
      %v1982 = vsel %vm878, %v1969, %v1971
      %v1983 = vsel %vm878, %v1973, %v1975
      %v1984 = vsel %vm878, %v1975, %v1977
      %v1985 = vsel %vm878, %v1977, %v1979
      %v1992 = vsel %vm1054, %v1957, 0
      %v1994 = vsel %vm1054, %v1959, 0
      %v1996 = vsel %vm1054, %v1961, 0
      %v1998 = vsel %vm1054, %v1963, 0
      %2000 = vmatpush.msra.mxu0 0.0
      %2001 = vmatpush.msra.mxu0 0.0
      %2002 = vmatpush.msra.mxu0 0.0
      %2003 = vmatpush.msra.mxu0 0.0
      %2004 = vmatpush.msra.mxu0 0.0
      %2005 = vmatpush.msra.mxu0 0.0
      %2006 = vmatpush.msra.mxu0 0.0
      %2007 = vmatpush.msra.mxu0 0.0
      %2008 = vmatpush.msra.mxu0 0.0
      %2009 = vmatpush.msra.mxu0 0.0
      %2010 = vmatpush.msra.mxu0 0.0
      %2011 = vmatpush.msra.mxu0 0.0
      %2012 = vmatpush.msra.mxu0 0.0
      %2013 = vmatpush.msra.mxu0 0.0
      %2014 = vmatpush.msra.mxu0 %v1983
      %2015 = vmatpush.msra.mxu0 %v1980
      %2016 = vmatmul.f32.gmra.mxu0 %v1992
      %v2017 = vpop.f32.mrf.mxu0
      %v2018 = vadd.f32 0.0, %v2017
      %2019 = vmatmul.f32.gmra.mxu0 %v1994
      %v2020 = vpop.f32.mrf.mxu0
      %v2021 = vadd.f32 0.0, %v2020
      %2022 = vmatmul.f32.gmra.mxu0 %v1996
      %v2023 = vpop.f32.mrf.mxu0
      %v2024 = vadd.f32 0.0, %v2023
      %2025 = vmatmul.f32.gmra.mxu0 %v1998
      %v2026 = vpop.f32.mrf.mxu0
      %v2027 = vadd.f32 0.0, %v2026
      %2028 = vdwg.mxu0
      %2029 = vmatpush.msra.mxu0 0.0
      %2030 = vmatpush.msra.mxu0 0.0
      %2031 = vmatpush.msra.mxu0 0.0
      %2032 = vmatpush.msra.mxu0 0.0
      %2033 = vmatpush.msra.mxu0 0.0
      %2034 = vmatpush.msra.mxu0 0.0
      %2035 = vmatpush.msra.mxu0 0.0
      %2036 = vmatpush.msra.mxu0 0.0
      %2037 = vmatpush.msra.mxu0 0.0
      %2038 = vmatpush.msra.mxu0 0.0
      %2039 = vmatpush.msra.mxu0 0.0
      %2040 = vmatpush.msra.mxu0 0.0
      %2041 = vmatpush.msra.mxu0 0.0
      %2042 = vmatpush.msra.mxu0 0.0
      %2043 = vmatpush.msra.mxu0 %v1984
      %2044 = vmatpush.msra.mxu0 %v1981
      %2045 = vmatmul.f32.gmra.mxu0 %v1992
      %v2046 = vpop.f32.mrf.mxu0
      %v2047 = vadd.f32 0.0, %v2046
      %2048 = vmatmul.f32.gmra.mxu0 %v1994
      %v2049 = vpop.f32.mrf.mxu0
      %v2050 = vadd.f32 0.0, %v2049
      %2051 = vmatmul.f32.gmra.mxu0 %v1996
      %v2052 = vpop.f32.mrf.mxu0
      %v2053 = vadd.f32 0.0, %v2052
      %2054 = vmatmul.f32.gmra.mxu0 %v1998
      %v2055 = vpop.f32.mrf.mxu0
      %v2056 = vadd.f32 0.0, %v2055
      %2057 = vdwg.mxu0
      %2058 = vmatpush.msra.mxu0 0.0
      %2059 = vmatpush.msra.mxu0 0.0
      %2060 = vmatpush.msra.mxu0 0.0
      %2061 = vmatpush.msra.mxu0 0.0
      %2062 = vmatpush.msra.mxu0 0.0
      %2063 = vmatpush.msra.mxu0 0.0
      %2064 = vmatpush.msra.mxu0 0.0
      %2065 = vmatpush.msra.mxu0 0.0
      %2066 = vmatpush.msra.mxu0 0.0
      %2067 = vmatpush.msra.mxu0 0.0
      %2068 = vmatpush.msra.mxu0 0.0
      %2069 = vmatpush.msra.mxu0 0.0
      %2070 = vmatpush.msra.mxu0 0.0
      %2071 = vmatpush.msra.mxu0 0.0
      %2072 = vmatpush.msra.mxu0 %v1985
      %2073 = vmatpush.msra.mxu0 %v1982
      %2074 = vmatmul.f32.gmra.mxu0 %v1992
      %v2075 = vpop.f32.mrf.mxu0
      %v2076 = vadd.f32 0.0, %v2075
      %2077 = vmatmul.f32.gmra.mxu0 %v1994
      %v2078 = vpop.f32.mrf.mxu0
      %v2079 = vadd.f32 0.0, %v2078
      %2080 = vmatmul.f32.gmra.mxu0 %v1996
      %v2081 = vpop.f32.mrf.mxu0
      %v2082 = vadd.f32 0.0, %v2081
      %2083 = vmatmul.f32.gmra.mxu0 %v1998
      %v2084 = vpop.f32.mrf.mxu0
      %v2085 = vadd.f32 0.0, %v2084
      %2086 = vdwg.mxu0
      %v2087 = vadd.f32 %v1944, %v2018
      %v2088 = vadd.f32 %v1945, %v2047
      %v2089 = vadd.f32 %v1946, %v2076
      %v2090 = vadd.f32 %v1947, %v2021
      %v2091 = vadd.f32 %v1948, %v2050
      %v2092 = vadd.f32 %v1949, %v2079
      %v2093 = vadd.f32 %v1950, %v2024
      %v2094 = vadd.f32 %v1951, %v2053
      %v2095 = vadd.f32 %v1952, %v2082
      %v2096 = vadd.f32 %v1953, %v2027
      %v2097 = vadd.f32 %v1954, %v2056
      %v2098 = vadd.f32 %v1955, %v2085
      %v2099 = vld [vmem:[%s4 + $0x8] sm:$0xff]
      %v2100 = vld [vmem:[%s4 + $0x18] sm:$0xff]
      %v2101 = vld [vmem:[%s4 + $0x28] sm:$0xff]
      %v2102 = vld [vmem:[%s4 + $0x38] sm:$0xff]
      %2103 = vrot.lane.b32.xlu0 %v1002, 82
      %v2104 = vpop.permute.xlu0 %2103
      %2105 = vrot.lane.b32.xlu0 %v1003, 82
      %v2106 = vpop.permute.xlu0 %2105
      %2107 = vrot.lane.b32.xlu0 %v1004, 82
      %v2108 = vpop.permute.xlu0 %2107
      %2109 = vrot.lane.b32.xlu0 %v1005, 82
      %v2110 = vpop.permute.xlu0 %2109
      %2111 = vrot.lane.b32.xlu0 %v1006, 82
      %v2112 = vpop.permute.xlu0 %2111
      %2113 = vrot.lane.b32.xlu0 %v1007, 82
      %v2114 = vpop.permute.xlu0 %2113
      %2115 = vrot.lane.b32.xlu0 %v1008, 82
      %v2116 = vpop.permute.xlu0 %2115
      %2117 = vrot.lane.b32.xlu0 %v1009, 82
      %v2118 = vpop.permute.xlu0 %2117
      %v2119 = vsel %vm941, %v2104, %v2106
      %v2120 = vsel %vm941, %v2106, %v2108
      %v2121 = vsel %vm941, %v2108, %v2110
      %v2122 = vsel %vm941, %v2112, %v2114
      %v2123 = vsel %vm941, %v2114, %v2116
      %v2124 = vsel %vm941, %v2116, %v2118
      %v2132 = vsel %vm1054, %v2099, 0
      %v2135 = vsel %vm1054, %v2100, 0
      %v2138 = vsel %vm1054, %v2101, 0
      %v2141 = vsel %vm1054, %v2102, 0
      %2143 = vmatpush.msra.mxu0 0.0
      %2144 = vmatpush.msra.mxu0 0.0
      %2145 = vmatpush.msra.mxu0 0.0
      %2146 = vmatpush.msra.mxu0 0.0
      %2147 = vmatpush.msra.mxu0 0.0
      %2148 = vmatpush.msra.mxu0 0.0
      %2149 = vmatpush.msra.mxu0 0.0
      %2150 = vmatpush.msra.mxu0 0.0
      %2151 = vmatpush.msra.mxu0 0.0
      %2152 = vmatpush.msra.mxu0 0.0
      %2153 = vmatpush.msra.mxu0 0.0
      %2154 = vmatpush.msra.mxu0 0.0
      %2155 = vmatpush.msra.mxu0 0.0
      %2156 = vmatpush.msra.mxu0 0.0
      %2157 = vmatpush.msra.mxu0 %v2122
      %2158 = vmatpush.msra.mxu0 %v2119
      %2159 = vmatmul.f32.gmra.mxu0 %v2132
      %v2160 = vpop.f32.mrf.mxu0
      %v2161 = vadd.f32 0.0, %v2160
      %2162 = vmatmul.f32.gmra.mxu0 %v2135
      %v2163 = vpop.f32.mrf.mxu0
      %v2164 = vadd.f32 0.0, %v2163
      %2165 = vmatmul.f32.gmra.mxu0 %v2138
      %v2166 = vpop.f32.mrf.mxu0
      %v2167 = vadd.f32 0.0, %v2166
      %2168 = vmatmul.f32.gmra.mxu0 %v2141
      %v2169 = vpop.f32.mrf.mxu0
      %v2170 = vadd.f32 0.0, %v2169
      %2171 = vdwg.mxu0
      %2172 = vmatpush.msra.mxu0 0.0
      %2173 = vmatpush.msra.mxu0 0.0
      %2174 = vmatpush.msra.mxu0 0.0
      %2175 = vmatpush.msra.mxu0 0.0
      %2176 = vmatpush.msra.mxu0 0.0
      %2177 = vmatpush.msra.mxu0 0.0
      %2178 = vmatpush.msra.mxu0 0.0
      %2179 = vmatpush.msra.mxu0 0.0
      %2180 = vmatpush.msra.mxu0 0.0
      %2181 = vmatpush.msra.mxu0 0.0
      %2182 = vmatpush.msra.mxu0 0.0
      %2183 = vmatpush.msra.mxu0 0.0
      %2184 = vmatpush.msra.mxu0 0.0
      %2185 = vmatpush.msra.mxu0 0.0
      %2186 = vmatpush.msra.mxu0 %v2123
      %2187 = vmatpush.msra.mxu0 %v2120
      %2188 = vmatmul.f32.gmra.mxu0 %v2132
      %v2189 = vpop.f32.mrf.mxu0
      %v2190 = vadd.f32 0.0, %v2189
      %2191 = vmatmul.f32.gmra.mxu0 %v2135
      %v2192 = vpop.f32.mrf.mxu0
      %v2193 = vadd.f32 0.0, %v2192
      %2194 = vmatmul.f32.gmra.mxu0 %v2138
      %v2195 = vpop.f32.mrf.mxu0
      %v2196 = vadd.f32 0.0, %v2195
      %2197 = vmatmul.f32.gmra.mxu0 %v2141
      %v2198 = vpop.f32.mrf.mxu0
      %v2199 = vadd.f32 0.0, %v2198
      %2200 = vdwg.mxu0
      %2201 = vmatpush.msra.mxu0 0.0
      %2202 = vmatpush.msra.mxu0 0.0
      %2203 = vmatpush.msra.mxu0 0.0
      %2204 = vmatpush.msra.mxu0 0.0
      %2205 = vmatpush.msra.mxu0 0.0
      %2206 = vmatpush.msra.mxu0 0.0
      %2207 = vmatpush.msra.mxu0 0.0
      %2208 = vmatpush.msra.mxu0 0.0
      %2209 = vmatpush.msra.mxu0 0.0
      %2210 = vmatpush.msra.mxu0 0.0
      %2211 = vmatpush.msra.mxu0 0.0
      %2212 = vmatpush.msra.mxu0 0.0
      %2213 = vmatpush.msra.mxu0 0.0
      %2214 = vmatpush.msra.mxu0 0.0
      %2215 = vmatpush.msra.mxu0 %v2124
      %2216 = vmatpush.msra.mxu0 %v2121
      %2217 = vmatmul.f32.gmra.mxu0 %v2132
      %v2218 = vpop.f32.mrf.mxu0
      %v2219 = vadd.f32 0.0, %v2218
      %2220 = vmatmul.f32.gmra.mxu0 %v2135
      %v2221 = vpop.f32.mrf.mxu0
      %v2222 = vadd.f32 0.0, %v2221
      %2223 = vmatmul.f32.gmra.mxu0 %v2138
      %v2224 = vpop.f32.mrf.mxu0
      %v2225 = vadd.f32 0.0, %v2224
      %2226 = vmatmul.f32.gmra.mxu0 %v2141
      %v2227 = vpop.f32.mrf.mxu0
      %v2228 = vadd.f32 0.0, %v2227
      %2229 = vdwg.mxu0
      %v2230 = vadd.f32 %v2087, %v2161
      %v2231 = vadd.f32 %v2088, %v2190
      %v2232 = vadd.f32 %v2089, %v2219
      %v2233 = vadd.f32 %v2090, %v2164
      %v2234 = vadd.f32 %v2091, %v2193
      %v2235 = vadd.f32 %v2092, %v2222
      %v2236 = vadd.f32 %v2093, %v2167
      %v2237 = vadd.f32 %v2094, %v2196
      %v2238 = vadd.f32 %v2095, %v2225
      %v2239 = vadd.f32 %v2096, %v2170
      %v2240 = vadd.f32 %v2097, %v2199
      %v2241 = vadd.f32 %v2098, %v2228
      %v2242 = vld [vmem:[%s5] sm:$0xff]
      %v2243 = vld [vmem:[%s5 + $0x8] sm:$0xff]
      %v2244 = vld [vmem:[%s5 + $0x10] sm:$0xff]
      %v2245 = vld [vmem:[%s5 + $0x18] sm:$0xff]
      %2247 = vset.pattern.permute.xlu0 0
      %2248 = vperm.xlu0 %2247, %v2242
      %v2249 = vpop.permute.xlu0 %2248
      %2252 = vset.pattern.permute.xlu0 0
      %2253 = vperm.xlu0 %2252, %v2243
      %v2254 = vpop.permute.xlu0 %2253
      %2257 = vset.pattern.permute.xlu0 0
      %2258 = vperm.xlu0 %2257, %v2244
      %v2259 = vpop.permute.xlu0 %2258
      %2262 = vset.pattern.permute.xlu0 0
      %2263 = vperm.xlu0 %2262, %v2245
      %v2264 = vpop.permute.xlu0 %2263
      %v2266 = vadd.f32 %v2230, %v2249
      %v2267 = vadd.f32 %v2231, %v2249
      %v2268 = vadd.f32 %v2232, %v2249
      %v2269 = vadd.f32 %v2233, %v2254
      %v2270 = vadd.f32 %v2234, %v2254
      %v2271 = vadd.f32 %v2235, %v2254
      %v2272 = vadd.f32 %v2236, %v2259
      %v2273 = vadd.f32 %v2237, %v2259
      %v2274 = vadd.f32 %v2238, %v2259
      %v2275 = vadd.f32 %v2239, %v2264
      %v2276 = vadd.f32 %v2240, %v2264
      %v2277 = vadd.f32 %v2241, %v2264
      %v2278 = vmax.f32 %v2266, 0.0
      %v2279 = vmax.f32 %v2267, 0.0
      %v2280 = vmax.f32 %v2268, 0.0
      %v2281 = vmax.f32 %v2269, 0.0
      %v2282 = vmax.f32 %v2270, 0.0
      %v2283 = vmax.f32 %v2271, 0.0
      %v2284 = vmax.f32 %v2272, 0.0
      %v2285 = vmax.f32 %v2273, 0.0
      %v2286 = vmax.f32 %v2274, 0.0
      %v2287 = vmax.f32 %v2275, 0.0
      %v2288 = vmax.f32 %v2276, 0.0
      %v2289 = vmax.f32 %v2277, 0.0
      %v2290 = vld [vmem:[%s6] sm:$0xff]
      %v2291 = vld [vmem:[%s6 + $0x8] sm:$0xff]
      %v2292 = vld [vmem:[%s6 + $0x10] sm:$0xff]
      %v2293 = vld [vmem:[%s6 + $0x18] sm:$0xff]
      %v2294 = vld [vmem:[%s6 + $0x20] sm:$0xff]
      %v2295 = vld [vmem:[%s6 + $0x28] sm:$0xff]
      %v2296 = vld [vmem:[%s6 + $0x30] sm:$0xff]
      %v2297 = vld [vmem:[%s6 + $0x38] sm:$0xff]
      %v2298 = vld [vmem:[%s6 + $0x40] sm:$0xff]
      %v2299 = vld [vmem:[%s6 + $0x48] sm:$0xff]
      %v2300 = vld [vmem:[%s6 + $0x50] sm:$0xff]
      %v2301 = vld [vmem:[%s6 + $0x58] sm:$0xff]
      %v2302 = vld [vmem:[%s6 + $0x60] sm:$0xff]
      %v2303 = vld [vmem:[%s6 + $0x68] sm:$0xff]
      %v2304 = vld [vmem:[%s6 + $0x70] sm:$0xff]
      %v2305 = vld [vmem:[%s6 + $0x78] sm:$0xff]
      %v2306 = vld [vmem:[%s6 + $0x80] sm:$0xff]
      %v2307 = vld [vmem:[%s6 + $0x88] sm:$0xff]
      %v2308 = vld [vmem:[%s6 + $0x90] sm:$0xff]
      %v2309 = vld [vmem:[%s6 + $0x98] sm:$0xff]
      %v2310 = vld [vmem:[%s6 + $0xa0] sm:$0xff]
      %v2311 = vld [vmem:[%s6 + $0xa8] sm:$0xff]
      %v2312 = vld [vmem:[%s6 + $0xb0] sm:$0xff]
      %v2313 = vld [vmem:[%s6 + $0xb8] sm:$0xff]
      %v2314 = vld [vmem:[%s6 + $0xc0] sm:$0xff]
      %v2315 = vld [vmem:[%s6 + $0xc8] sm:$0xff]
      %v2316 = vld [vmem:[%s6 + $0xd0] sm:$0xff]
      %v2317 = vld [vmem:[%s6 + $0xd8] sm:$0xff]
      %v2318 = vld [vmem:[%s6 + $0xe0] sm:$0xff]
      %v2319 = vld [vmem:[%s6 + $0xe8] sm:$0xff]
      %v2320 = vld [vmem:[%s6 + $0xf0] sm:$0xff]
      %v2321 = vld [vmem:[%s6 + $0xf8] sm:$0xff]
      %v2322 = vld [vmem:[%s6 + $0x100] sm:$0xff]
      %v2323 = vld [vmem:[%s6 + $0x108] sm:$0xff]
      %v2324 = vld [vmem:[%s6 + $0x110] sm:$0xff]
      %v2325 = vld [vmem:[%s6 + $0x118] sm:$0xff]
      %v2326 = vld [vmem:[%s6 + $0x120] sm:$0xff]
      %v2327 = vld [vmem:[%s6 + $0x128] sm:$0xff]
      %v2328 = vld [vmem:[%s6 + $0x130] sm:$0xff]
      %v2329 = vld [vmem:[%s6 + $0x138] sm:$0xff]
      %v2330 = vld [vmem:[%s6 + $0x140] sm:$0xff]
      %v2331 = vld [vmem:[%s6 + $0x148] sm:$0xff]
      %v2332 = vld [vmem:[%s6 + $0x150] sm:$0xff]
      %v2333 = vld [vmem:[%s6 + $0x158] sm:$0xff]
      %v2334 = vld [vmem:[%s6 + $0x160] sm:$0xff]
      %v2335 = vld [vmem:[%s6 + $0x168] sm:$0xff]
      %v2336 = vld [vmem:[%s6 + $0x170] sm:$0x3f]
      %vm2337 = vcmask 965632
      %v2339 = vsel %vm2337, %v2280, 0
      %v2342 = vsel %vm2337, %v2283, 0
      %v2345 = vsel %vm2337, %v2286, 0
      %v2348 = vsel %vm2337, %v2289, 0
      %vm2350 = vcmask 1045504
      %v2352 = vsel %vm2350, %v2336, 0
      %2354 = vmatpush.msra.mxu0 %v2305
      %2355 = vmatpush.msra.mxu0 %v2304
      %2356 = vmatpush.msra.mxu0 %v2303
      %2357 = vmatpush.msra.mxu0 %v2302
      %2358 = vmatpush.msra.mxu0 %v2301
      %2359 = vmatpush.msra.mxu0 %v2300
      %2360 = vmatpush.msra.mxu0 %v2299
      %2361 = vmatpush.msra.mxu0 %v2298
      %2362 = vmatpush.msra.mxu0 %v2297
      %2363 = vmatpush.msra.mxu0 %v2296
      %2364 = vmatpush.msra.mxu0 %v2295
      %2365 = vmatpush.msra.mxu0 %v2294
      %2366 = vmatpush.msra.mxu0 %v2293
      %2367 = vmatpush.msra.mxu0 %v2292
      %2368 = vmatpush.msra.mxu0 %v2291
      %2369 = vmatpush.msra.mxu0 %v2290
      %2370 = vmatmul.f32.gmra.mxu0 %v2278
      %v2371 = vpop.f32.mrf.mxu0
      %v2372 = vadd.f32 0.0, %v2371
      %2373 = vmatmul.f32.gmra.mxu0 %v2281
      %v2374 = vpop.f32.mrf.mxu0
      %v2375 = vadd.f32 0.0, %v2374
      %2376 = vmatmul.f32.gmra.mxu0 %v2284
      %v2377 = vpop.f32.mrf.mxu0
      %v2378 = vadd.f32 0.0, %v2377
      %2379 = vmatmul.f32.gmra.mxu0 %v2287
      %v2380 = vpop.f32.mrf.mxu0
      %v2381 = vadd.f32 0.0, %v2380
      %2382 = vdwg.mxu0
      %2383 = vmatpush.msra.mxu0 %v2321
      %2384 = vmatpush.msra.mxu0 %v2320
      %2385 = vmatpush.msra.mxu0 %v2319
      %2386 = vmatpush.msra.mxu0 %v2318
      %2387 = vmatpush.msra.mxu0 %v2317
      %2388 = vmatpush.msra.mxu0 %v2316
      %2389 = vmatpush.msra.mxu0 %v2315
      %2390 = vmatpush.msra.mxu0 %v2314
      %2391 = vmatpush.msra.mxu0 %v2313
      %2392 = vmatpush.msra.mxu0 %v2312
      %2393 = vmatpush.msra.mxu0 %v2311
      %2394 = vmatpush.msra.mxu0 %v2310
      %2395 = vmatpush.msra.mxu0 %v2309
      %2396 = vmatpush.msra.mxu0 %v2308
      %2397 = vmatpush.msra.mxu0 %v2307
      %2398 = vmatpush.msra.mxu0 %v2306
      %2399 = vmatmul.f32.gmra.mxu0 %v2279
      %v2400 = vpop.f32.mrf.mxu0
      %v2401 = vadd.f32 %v2372, %v2400
      %2402 = vmatmul.f32.gmra.mxu0 %v2282
      %v2403 = vpop.f32.mrf.mxu0
      %v2404 = vadd.f32 %v2375, %v2403
      %2405 = vmatmul.f32.gmra.mxu0 %v2285
      %v2406 = vpop.f32.mrf.mxu0
      %v2407 = vadd.f32 %v2378, %v2406
      %2408 = vmatmul.f32.gmra.mxu0 %v2288
      %v2409 = vpop.f32.mrf.mxu0
      %v2410 = vadd.f32 %v2381, %v2409
      %2411 = vdwg.mxu0
      %2412 = vmatpush.msra.mxu0 0.0
      %2413 = vmatpush.msra.mxu0 %v2352
      %2414 = vmatpush.msra.mxu0 %v2335
      %2415 = vmatpush.msra.mxu0 %v2334
      %2416 = vmatpush.msra.mxu0 %v2333
      %2417 = vmatpush.msra.mxu0 %v2332
      %2418 = vmatpush.msra.mxu0 %v2331
      %2419 = vmatpush.msra.mxu0 %v2330
      %2420 = vmatpush.msra.mxu0 %v2329
      %2421 = vmatpush.msra.mxu0 %v2328
      %2422 = vmatpush.msra.mxu0 %v2327
      %2423 = vmatpush.msra.mxu0 %v2326
      %2424 = vmatpush.msra.mxu0 %v2325
      %2425 = vmatpush.msra.mxu0 %v2324
      %2426 = vmatpush.msra.mxu0 %v2323
      %2427 = vmatpush.msra.mxu0 %v2322
      %2428 = vmatmul.f32.gmra.mxu0 %v2339
      %v2429 = vpop.f32.mrf.mxu0
      %v2430 = vadd.f32 %v2401, %v2429
      %2431 = vmatmul.f32.gmra.mxu0 %v2342
      %v2432 = vpop.f32.mrf.mxu0
      %v2433 = vadd.f32 %v2404, %v2432
      %2434 = vmatmul.f32.gmra.mxu0 %v2345
      %v2435 = vpop.f32.mrf.mxu0
      %v2436 = vadd.f32 %v2407, %v2435
      %2437 = vmatmul.f32.gmra.mxu0 %v2348
      %v2438 = vpop.f32.mrf.mxu0
      %v2439 = vadd.f32 %v2410, %v2438
      %2440 = vdwg.mxu0
      %vm2441 = vcmask 138240
      %v2442 = vsel %vm2441, %v2430, -inf
      %2443 = vmax.xlane.f32.xlu0 %v2442
      %v2444 = vpop.xlane.xlu0 %2443
      %v2445 = vsel %vm2441, %v2433, -inf
      %2446 = vmax.xlane.f32.xlu0 %v2445
      %v2447 = vpop.xlane.xlu0 %2446
      %v2448 = vsel %vm2441, %v2436, -inf
      %2449 = vmax.xlane.f32.xlu0 %v2448
      %v2450 = vpop.xlane.xlu0 %2449
      %v2451 = vsel %vm2441, %v2439, -inf
      %2452 = vmax.xlane.f32.xlu0 %v2451
      %v2453 = vpop.xlane.xlu0 %2452
      %v2454 = vsel %vm2441, %v2430, 0.0
      %2455 = vadd.xlane.f32.xlu0 %v2454
      %v2456 = vpop.xlane.xlu0 %2455
      %v2457 = vsel %vm2441, %v2433, 0.0
      %2458 = vadd.xlane.f32.xlu0 %v2457
      %v2459 = vpop.xlane.xlu0 %2458
      %v2460 = vsel %vm2441, %v2436, 0.0
      %2461 = vadd.xlane.f32.xlu0 %v2460
      %v2462 = vpop.xlane.xlu0 %2461
      %v2463 = vsel %vm2441, %v2439, 0.0
      %2464 = vadd.xlane.f32.xlu0 %v2463
      %v2465 = vpop.xlane.xlu0 %2464
      %v2466 = vrcp.pop 17.0
      %v2467 = vmul.f32 17.0, %v2466
      %v2468 = vsub.f32 1.0, %v2467
      %v2469 = vmul.f32 %v2466, %v2468
      %v2470 = vadd.f32 %v2466, %v2469
      %vm2471 = vweird.f32 %v2466
      %v2472 = vsel %vm2471, %v2466, %v2470
      %v2473 = vmul.f32 %v2456, %v2472
      %v2474 = vmul.f32 %v2459, %v2472
      %v2475 = vmul.f32 %v2462, %v2472
      %v2476 = vmul.f32 %v2465, %v2472
      %v2477 = vadd.f32 %v2444, %v2473
      %v2478 = vadd.f32 %v2447, %v2474
      %v2479 = vadd.f32 %v2450, %v2475
      %v2480 = vadd.f32 %v2453, %v2476
      %v2481 = vld [vmem:[%s7] sm:$0xff]
      %v2482 = vld [vmem:[%s7 + $0x8] sm:$0xff]
      %v2483 = vld [vmem:[%s8] sm:$0xff]
      %v2484 = vld [vmem:[%s8 + $0x8] sm:$0xff]
      %vm2485 = vcmask 261120
      %v2487 = vsel %vm2485, %v2481, 0
      %v2490 = vsel %vm2485, %v2482, 0
      %2492 = vmatpush.msra.mxu0 0.0
      %2493 = vmatpush.msra.mxu0 0.0
      %2494 = vmatpush.msra.mxu0 0.0
      %2495 = vmatpush.msra.mxu0 0.0
      %2496 = vmatpush.msra.mxu0 0.0
      %2497 = vmatpush.msra.mxu0 0.0
      %2498 = vmatpush.msra.mxu0 0.0
      %2499 = vmatpush.msra.mxu0 0.0
      %2500 = vmatpush.msra.mxu0 0.0
      %2501 = vmatpush.msra.mxu0 0.0
      %2502 = vmatpush.msra.mxu0 0.0
      %2503 = vmatpush.msra.mxu0 0.0
      %2504 = vmatpush.msra.mxu0 %v2480
      %2505 = vmatpush.msra.mxu0 %v2479
      %2506 = vmatpush.msra.mxu0 %v2478
      %2507 = vmatpush.msra.mxu0 %v2477
      %2508 = vmatmul.f32.gmra.mxu0 %v2487
      %v2509 = vpop.f32.mrf.mxu0
      %v2510 = vadd.f32 %v2483, %v2509
      %2511 = vmatmul.f32.gmra.mxu0 %v2490
      %v2512 = vpop.f32.mrf.mxu0
      %v2513 = vadd.f32 %v2484, %v2512
      %2514 = vdwg.mxu0
      %v2515 = vmax.f32 %v2510, 0.0
      %v2516 = vmax.f32 %v2513, 0.0
      %vm2517 = vcmask 7168
      %2518 = vst.msk [vmem:[%s417] sm:$0xff] %vm2517, %v2515
      %2519 = vst.msk [vmem:[%s417 + $0x8] sm:$0xff] %vm2517, %v2516
      %v2520 = vld [vmem:[%s9] sm:$0xf]
      %v2521 = vld [vmem:[%s10] sm:$0xf]
      %v2523 = vsel %vm1054, %v2520, 0
      %2525 = vmatpush.msra.mxu0 0.0
      %2526 = vmatpush.msra.mxu0 0.0
      %2527 = vmatpush.msra.mxu0 0.0
      %2528 = vmatpush.msra.mxu0 0.0
      %2529 = vmatpush.msra.mxu0 0.0
      %2530 = vmatpush.msra.mxu0 0.0
      %2531 = vmatpush.msra.mxu0 0.0
      %2532 = vmatpush.msra.mxu0 0.0
      %2533 = vmatpush.msra.mxu0 0.0
      %2534 = vmatpush.msra.mxu0 0.0
      %2535 = vmatpush.msra.mxu0 0.0
      %2536 = vmatpush.msra.mxu0 0.0
      %2537 = vmatpush.msra.mxu0 0.0
      %2538 = vmatpush.msra.mxu0 0.0
      %2539 = vmatpush.msra.mxu0 %v2516
      %2540 = vmatpush.msra.mxu0 %v2515
      %2541 = vmatmul.f32.gmra.mxu0 %v2523
      %v2542 = vpop.f32.mrf.mxu0
      %v2543 = vadd.f32 %v2521, %v2542
      %2544 = vdwg.mxu0
      %v2545 = vxor.u32 %v2543, 2147483648
      %v2546 = vmul.f32 %v2545, 1.442695
      %v2547 = vpow.pop %v2546
      %v2548 = vadd.f32 %v2547, 1.0
      %v2549 = vrcp.pop %v2548
      %v2550 = vmul.f32 %v2548, %v2549
      %v2551 = vsub.f32 1.0, %v2550
      %v2552 = vmul.f32 %v2549, %v2551
      %v2553 = vadd.f32 %v2549, %v2552
      %vm2554 = vweird.f32 %v2548
      %vm2555 = vweird.f32 %v2549
      %vm2556 = vmor %vm2554, %vm2555
      %v2557 = vsel %vm2556, %v2549, %v2553
      %v2558 = vand.u32 2147483647, %v2548
      %vm2559 = vcmp.eq.f32.partialorder %v2558, 8.507059e+37
      %v2560 = vand.u32 %v2548, 2147483648
      %v2561 = vor.u32 1.1754944e-38, %v2560
      %v2562 = vsel %vm2559, %v2561, %v2557
      %v2563 = vmul.f32 1.0, %v2562
      %vm2564 = vcmask 3072
      %2565 = vst.msk [vmem:[%s421] sm:$0xf] %vm2564, %v2563
      %p2566 = scmp.lt.s32.totalorder %s24, 1
      %s2567 = scalar_select %p2566, %s24, 1
      %s2568 = smul.addr %s2567, 2
      %s2569 = smul.addr %s2568, 8
      %s2570 = scalar_lea.vmem %s11, %s2569
      %p2571 = scmp.lt.s32.totalorder %s24, 1
      %s2572 = scalar_select %p2571, %s24, 1
      %s2573 = smul.addr %s2572, 4
      %s2574 = scalar_lea.vmem %s12, %s2573
      // Predicated region
      $region65: #{cnn_scatter_forward.1} parent=63 // pred_check
        %p2575 = pneg %p278
      $region66: #{cnn_scatter_forward.1} parent=63 // pred_check_branch
        %2577 = sbr.rel (%p2575) target = $region68
      $region67: #{cnn_scatter_forward.1} parent=63 // pred_region
        _
      $region68: #{cnn_scatter_forward.1} parent=63 // pred_fallthru
        _
      // Predicated region
      $region69: #{cnn_scatter_forward.1} parent=63 // pred_check
        %p2578 = pneg %p304
      $region70: #{cnn_scatter_forward.1} parent=63 // pred_check_branch
        %2580 = sbr.rel (%p2578) target = $region72
      $region71: #{cnn_scatter_forward.1} parent=63 // pred_region
        _
      $region72: #{cnn_scatter_forward.1} parent=63 // pred_fallthru
        _
    $region64: #{cnn_scatter_forward.1} parent=5 // pred_fallthru
      _
    %p2581 = scmp.le.s32.totalorder 2, %s19
    // Predicated region
    $region73: #{cnn_scatter_forward.1} parent=5 // pred_check
      %p2582 = pneg %p2581
    $region74: #{cnn_scatter_forward.1} parent=5 // pred_check_branch
      %2584 = sbr.rel (%p2582) target = $region76
    $region75: #{cnn_scatter_forward.1} parent=5 // pred_region
      %s2585 = ssub.s32 %s19, 2
      // Predicated region
      $region77: #{cnn_scatter_forward.1} parent=75 // pred_check
        %p2586 = pneg %p284
      $region78: #{cnn_scatter_forward.1} parent=75 // pred_check_branch
        %2588 = sbr.rel (%p2586) target = $region80
      $region79: #{cnn_scatter_forward.1} parent=75 // pred_region
        %p2589 = scmp.lt.s32.totalorder %s25, 1
        %s2590 = scalar_select %p2589, %s25, 1
        %s2591 = smul.addr %s2590, 2
        %s2592 = smul.addr %s2591, 8
        %s2593 = scalar_lea.vmem %s11, %s2592
      $region80: #{cnn_scatter_forward.1} parent=75 // pred_fallthru
        _
      // Predicated region
      $region81: #{cnn_scatter_forward.1} parent=75 // pred_check
        %p2594 = pneg %p310
      $region82: #{cnn_scatter_forward.1} parent=75 // pred_check_branch
        %2596 = sbr.rel (%p2594) target = $region84
      $region83: #{cnn_scatter_forward.1} parent=75 // pred_region
        %p2597 = scmp.lt.s32.totalorder %s25, 1
        %s2598 = scalar_select %p2597, %s25, 1
        %s2599 = smul.addr %s2598, 4
        %s2600 = scalar_lea.vmem %s12, %s2599
      $region84: #{cnn_scatter_forward.1} parent=75 // pred_fallthru
        _
    $region76: #{cnn_scatter_forward.1} parent=5 // pred_fallthru
      _
  $region6: #{cnn_scatter_forward.1} parent=0 // loop_footer
    %s23 = sadd.s32 1, %s19
  $region7: #{cnn_scatter_forward.1} parent=0 // loop_footer_branch
    %18 = sbr.rel target = $region3
  $region8: #{cnn_scatter_forward.1} parent=0 // loop_exit
    _

</llo_original>
